<compile_context>
chip_gen: v5e
topology: v5e:2x2
jax: 0.10.0
libtpu: 0.0.40
codegen_flags: <defaults>
</compile_context>

<pallas_src>
import functools

import jax
import jax.numpy as jnp
from jax.experimental import pallas as pl
from jax.experimental.pallas import tpu as pltpu


def _spec(shape):
    # single-block spec: the whole array is one VMEM tile (all operands here
    # total ~1.3 MB, far below VMEM on every TPU generation).
    nd = len(shape)
    return pl.BlockSpec(shape, lambda i, _n=nd: (0,) * _n)


# ---------------------------------------------------------------------------
# Fused Ensemble forward kernel
# ---------------------------------------------------------------------------
def _ensemble_kernel(x_ref, ctx_ref, g_ref, fe_w_ref, fe_b_ref,
                     cs_w_ref, cs_b_ref, ln_g_ref, ln_b_ref,
                     head_w_ref, head_b_ref, *out_refs,
                     D, inv_tau, eps, flag, is_rep, has_context):
    # --- feature extractor(s): one (B,K) @ (K, D or 2D) bf16 MXU op ---------
    feat = jnp.dot(x_ref[...], fe_w_ref[...],
                   preferred_element_type=jnp.float32) + fe_b_ref[...]
    feat = jnp.maximum(feat, 0.0)                       # f32 activations
    rep = feat[:, :D] if is_rep else feat               # local extractor

    # --- Gate input: broadcast (1, D) normalized context; skip if absent ----
    gate_in = rep * ctx_ref[...] if has_context else rep

    # --- ConditionalSelection: Linear(D,2D) -> LayerNorm(2D) -> ReLU --------
    h = jnp.dot(gate_in.astype(jnp.bfloat16), cs_w_ref[...],
                preferred_element_type=jnp.float32) + cs_b_ref[...]
    mu = jnp.mean(h, axis=-1, keepdims=True)
    var = jnp.mean(jnp.square(h - mu), axis=-1, keepdims=True)
    h = (h - mu) * jax.lax.rsqrt(var + eps)
    h = jnp.maximum(h * ln_g_ref[...] + ln_b_ref[...], 0.0)

    # --- gumbel_softmax over the 2-way channel split (soft path) ------------
    # gumbel arrives lane-dense as (B, 2D): [:, :D] -> pm logits, [:, D:] -> gm.
    logits = (h + g_ref[...]) * inv_tau                  # one (B,2D) VPU op
    l0 = logits[:, :D]
    l1 = logits[:, D:]
    m = jnp.maximum(l0, l1)
    e0 = jnp.exp(l0 - m)
    e1 = jnp.exp(l1 - m)
    inv = pl.reciprocal(e0 + e1, approx=True)            # EUP slot
    pm = e0 * inv
    gm = e1 * inv

    # --- head(s): single MXU op, lane-padded (Npad=128) class dimension -----
    if flag == 0:
        head_in = jnp.concatenate([rep * pm, rep * gm], axis=-1)   # (B, 2D)
    elif flag == 1:
        head_in = rep * pm
    else:
        head_in = rep * gm
    out = jnp.dot(head_in.astype(jnp.bfloat16), head_w_ref[...],
                  preferred_element_type=jnp.float32) + head_b_ref[...]
    out_refs[0][...] = out

    if is_rep:
        out_refs[1][...] = rep                           # model.feature_extractor(x)
        out_refs[2][...] = feat[:, D:]                   # frozen feature_extractor(x)


# ---------------------------------------------------------------------------
# Wrapper: parameter packing (concat / pad / bf16 cast) + one pallas_call
# ---------------------------------------------------------------------------
def ensemble_forward(params, x, gumbel, context=None, is_rep=False,
                     flag=0, tau=1.0):
    f32, bf16 = jnp.float32, jnp.bfloat16
    B = x.shape[0]
    x_flat = x.reshape(B, -1).astype(bf16)               # NCHW -> [B, K]
    K = x_flat.shape[1]
    D = params["fe_local_w"].shape[1]
    N = params["head_w"].shape[1]
    NPAD = ((N + 127) // 128) * 128
    # the h[:, :D] / h[:, D:] split must stay on a lane-tile boundary
    assert D % 128 == 0, "D must be a multiple of 128"

    # fused feature-extractor weights (local || global when is_rep)
    if is_rep:
        fe_w = jnp.concatenate(
            [params["fe_local_w"], params["fe_global_w"]], axis=1).astype(bf16)
        fe_b = jnp.concatenate(
            [params["fe_local_b"], params["fe_global_b"]])[None, :].astype(f32)
        fe_cols = 2 * D
    else:
        fe_w = params["fe_local_w"].astype(bf16)
        fe_b = params["fe_local_b"][None, :].astype(f32)
        fe_cols = D

    # head weights: merged (flag==0) and zero-padded to a 128-lane slab
    def _pad_cols(w):
        return jnp.pad(w, ((0, 0), (0, NPAD - N)))
    if flag == 0:
        head_w = _pad_cols(jnp.concatenate(
            [params["head_w"], params["head_g_w"]], axis=0)).astype(bf16)
        head_b = jnp.pad(params["head_b"] + params["head_g_b"],
                         (0, NPAD - N))[None, :].astype(f32)
        head_rows = 2 * D
    elif flag == 1:
        head_w = _pad_cols(params["head_w"]).astype(bf16)
        head_b = jnp.pad(params["head_b"], (0, NPAD - N))[None, :].astype(f32)
        head_rows = D
    else:
        head_w = _pad_cols(params["head_g_w"]).astype(bf16)
        head_b = jnp.pad(params["head_g_b"], (0, NPAD - N))[None, :].astype(f32)
        head_rows = D

    cs_w = params["cs_w"].astype(bf16)
    cs_b = params["cs_b"][None, :].astype(f32)
    ln_g = params["cs_gamma"][None, :].astype(f32)
    ln_b = params["cs_beta"][None, :].astype(f32)

    # F.normalize(context, p=2, dim=1); broadcast happens inside the kernel
    if context is not None:
        nrm = jnp.maximum(jnp.linalg.norm(context, axis=1, keepdims=True), 1e-12)
        ctx = (context / nrm).astype(f32)                 # (1, D)
        has_context = True
    else:
        ctx = jnp.ones((1, D), f32)                       # placeholder (unused)
        has_context = False

    # gumbel noise: canonical (2, B, D) -> lane-dense (B, 2D) slab
    g2d = jnp.concatenate([gumbel[0], gumbel[1]], axis=-1).astype(f32)

    out_shapes = [jax.ShapeDtypeStruct((B, NPAD), f32)]
    out_specs = [_spec((B, NPAD))]
    if is_rep:
        out_shapes += [jax.ShapeDtypeStruct((B, D), f32)] * 2
        out_specs += [_spec((B, D))] * 2

    kernel = functools.partial(
        _ensemble_kernel, D=D, inv_tau=1.0 / float(tau), eps=1e-5,
        flag=int(flag), is_rep=bool(is_rep), has_context=has_context)

    results = pl.pallas_call(
        kernel,
        grid=(1,),
        in_specs=[
            _spec((B, K)),                # x_flat (bf16)
            _spec((1, D)),                # normalized context
            _spec((B, 2 * D)),            # gumbel noise, lane-dense (f32)
            _spec((K, fe_cols)),          # fused fe weights (bf16)
            _spec((1, fe_cols)),          # fused fe bias (f32)
            _spec((D, 2 * D)),            # cs weight (bf16)
            _spec((1, 2 * D)),            # cs bias
            _spec((1, 2 * D)),            # layernorm gamma
            _spec((1, 2 * D)),            # layernorm beta
            _spec((head_rows, NPAD)),     # merged head weight (bf16)
            _spec((1, NPAD)),             # merged head bias
        ],
        out_specs=tuple(out_specs),
        out_shape=tuple(out_shapes),
        compiler_params=pltpu.CompilerParams(
            dimension_semantics=("arbitrary",)),
    )(x_flat, ctx, g2d, fe_w, fe_b, cs_w, cs_b, ln_g, ln_b, head_w, head_b)

    output = results[0][:, :N]                            # drop lane padding
    if is_rep:
        return output, results[1], results[2]
    return output


# ---------------------------------------------------------------------------
# Pure-JAX f32 (HIGHEST precision) reference for correctness checking
# ---------------------------------------------------------------------------
def reference_forward(params, x, gumbel, context=None, tau=1.0, flag=0):
    hi = jax.lax.Precision.HIGHEST
    B = x.shape[0]
    xf = x.reshape(B, -1)
    rep = jnp.maximum(jnp.dot(xf, params["fe_local_w"], precision=hi)
                      + params["fe_local_b"], 0.0)
    D = rep.shape[1]
    if context is not None:
        nrm = jnp.maximum(jnp.linalg.norm(context, axis=1, keepdims=True), 1e-12)
        gate_in = rep * jnp.tile(context / nrm, (B, 1))
    else:
        gate_in = rep
    h = jnp.dot(gate_in, params["cs_w"], precision=hi) + params["cs_b"]
    mu = jnp.mean(h, axis=-1, keepdims=True)
    var = jnp.mean(jnp.square(h - mu), axis=-1, keepdims=True)
    h = (h - mu) / jnp.sqrt(var + 1e-5) * params["cs_gamma"] + params["cs_beta"]
    h = jnp.maximum(h, 0.0)
    logits = jnp.stack([h[:, :D], h[:, D:]], axis=0)          # [2, B, D]
    y = jax.nn.softmax((logits + gumbel) / tau, axis=0)
    pm, gm = y[0], y[1]
    if flag == 0:
        out = (jnp.dot(rep * pm, params["head_w"], precision=hi) + params["head_b"]
               + jnp.dot(rep * gm, params["head_g_w"], precision=hi)
               + params["head_g_b"])
    elif flag == 1:
        out = jnp.dot(rep * pm, params["head_w"], precision=hi) + params["head_b"]
    else:
        out = jnp.dot(rep * gm, params["head_g_w"], precision=hi) + params["head_g_b"]
    rep_global = jnp.maximum(jnp.dot(xf, params["fe_global_w"], precision=hi)
                             + params["fe_global_b"], 0.0)
    return out, rep, rep_global


if __name__ == "__main__":
    B, C, H, W = 8, 4, 16, 16
    K = C * H * W
    D = 128
    NUM_CLASSES = 10

    root = jax.random.PRNGKey(0)
    ks = jax.random.split(root, 16)

    def w_init(k, shape):
        return jax.random.normal(k, shape, jnp.float32) / jnp.sqrt(shape[0])

    params = {
        "fe_local_w": w_init(ks[0], (K, D)),
        "fe_local_b": jax.random.normal(ks[1], (D,), jnp.float32) * 0.01,
        "fe_global_w": w_init(ks[2], (K, D)),
        "fe_global_b": jax.random.normal(ks[3], (D,), jnp.float32) * 0.01,
        "head_w": w_init(ks[4], (D, NUM_CLASSES)),
        "head_b": jax.random.normal(ks[5], (NUM_CLASSES,), jnp.float32) * 0.01,
        "head_g_w": w_init(ks[6], (D, NUM_CLASSES)),
        "head_g_b": jax.random.normal(ks[7], (NUM_CLASSES,), jnp.float32) * 0.01,
        "cs_w": w_init(ks[8], (D, 2 * D)),
        "cs_b": jax.random.normal(ks[9], (2 * D,), jnp.float32) * 0.01,
        "cs_gamma": jnp.ones((2 * D,), jnp.float32),
        "cs_beta": jnp.zeros((2 * D,), jnp.float32),
    }

    x = jax.random.normal(ks[10], (B, C, H, W), jnp.float32)
    context = jax.random.normal(ks[11], (1, D), jnp.float32)
    # deterministic gumbel noise for F.gumbel_softmax (dim=1 of view [B, 2, D])
    gumbel = jax.random.gumbel(ks[12], (2, B, D), jnp.float32)

    # Tolerance documents the bf16-MXU-operand + approx-reciprocal accuracy
    # tradeoff vs the f32 HIGHEST-precision reference.
    TOL = dict(rtol=5e-2, atol=5e-2)

    # 1) standard FedCP path: flag=0, is_rep=True, with context
    out, rep, rep_g = ensemble_forward(params, x, gumbel, context=context,
                                       is_rep=True, flag=0, tau=1.0)
    jax.block_until_ready((out, rep, rep_g))
    r_out, r_rep, r_repg = reference_forward(params, x, gumbel,
                                             context=context, tau=1.0, flag=0)
    assert jnp.allclose(out, r_out, **TOL)
    assert jnp.allclose(rep, r_rep, **TOL)
    assert jnp.allclose(rep_g, r_repg, **TOL)

    # 2) personalized-head-only path: flag=1, is_rep=False, with context
    out1 = ensemble_forward(params, x, gumbel, context=context,
                            is_rep=False, flag=1, tau=1.0)
    jax.block_until_ready(out1)
    r_out1, _, _ = reference_forward(params, x, gumbel, context=context,
                                     tau=1.0, flag=1)
    assert jnp.allclose(out1, r_out1, **TOL)

    # 3) global-head-only path: flag=2, is_rep=False, no context
    out2 = ensemble_forward(params, x, gumbel, context=None,
                            is_rep=False, flag=2, tau=1.0)
    jax.block_until_ready(out2)
    r_out2, _, _ = reference_forward(params, x, gumbel, context=None,
                                     tau=1.0, flag=2)
    assert jnp.allclose(out2, r_out2, **TOL)

    print("KERNEL_OK")
</pallas_src>

<mosaic_0001>
module attributes {stable_mosaic.version = 11 : i64} {
  func.func @_ensemble_kernel(%arg0: i32, %arg1: memref<8x1024xbf16, #tpu.memory_space<vmem>>, %arg2: memref<1x128xf32, #tpu.memory_space<vmem>>, %arg3: memref<8x256xf32, #tpu.memory_space<vmem>>, %arg4: memref<1024x256xbf16, #tpu.memory_space<vmem>>, %arg5: memref<1x256xf32, #tpu.memory_space<vmem>>, %arg6: memref<128x256xbf16, #tpu.memory_space<vmem>>, %arg7: memref<1x256xf32, #tpu.memory_space<vmem>>, %arg8: memref<1x256xf32, #tpu.memory_space<vmem>>, %arg9: memref<1x256xf32, #tpu.memory_space<vmem>>, %arg10: memref<256x128xbf16, #tpu.memory_space<vmem>>, %arg11: memref<1x128xf32, #tpu.memory_space<vmem>>, %arg12: memref<8x128xf32, #tpu.memory_space<vmem>>, %arg13: memref<8x128xf32, #tpu.memory_space<vmem>>, %arg14: memref<8x128xf32, #tpu.memory_space<vmem>>) attributes {dimension_semantics = [#tpu.dimension_semantics<arbitrary>], iteration_bounds = array<i64: 1>, scalar_prefetch = 0 : i64, scratch_operands = 0 : i64, tpu.core_type = #tpu.core_type<tc>, window_params = [{pipeline_mode = #tpu.pipeline_mode<synchronous>, transform_indices = @transform_0, window_bounds = array<i64: 8, 1024>}, {pipeline_mode = #tpu.pipeline_mode<synchronous>, transform_indices = @transform_1, window_bounds = array<i64: 1, 128>}, {pipeline_mode = #tpu.pipeline_mode<synchronous>, transform_indices = @transform_2, window_bounds = array<i64: 8, 256>}, {pipeline_mode = #tpu.pipeline_mode<synchronous>, transform_indices = @transform_3, window_bounds = array<i64: 1024, 256>}, {pipeline_mode = #tpu.pipeline_mode<synchronous>, transform_indices = @transform_4, window_bounds = array<i64: 1, 256>}, {pipeline_mode = #tpu.pipeline_mode<synchronous>, transform_indices = @transform_5, window_bounds = array<i64: 128, 256>}, {pipeline_mode = #tpu.pipeline_mode<synchronous>, transform_indices = @transform_6, window_bounds = array<i64: 1, 256>}, {pipeline_mode = #tpu.pipeline_mode<synchronous>, transform_indices = @transform_7, window_bounds = array<i64: 1, 256>}, {pipeline_mode = #tpu.pipeline_mode<synchronous>, transform_indices = @transform_8, window_bounds = array<i64: 1, 256>}, {pipeline_mode = #tpu.pipeline_mode<synchronous>, transform_indices = @transform_9, window_bounds = array<i64: 256, 128>}, {pipeline_mode = #tpu.pipeline_mode<synchronous>, transform_indices = @transform_10, window_bounds = array<i64: 1, 128>}, {pipeline_mode = #tpu.pipeline_mode<synchronous>, transform_indices = @transform_11, window_bounds = array<i64: 8, 128>}, {pipeline_mode = #tpu.pipeline_mode<synchronous>, transform_indices = @transform_12, window_bounds = array<i64: 8, 128>}, {pipeline_mode = #tpu.pipeline_mode<synchronous>, transform_indices = @transform_13, window_bounds = array<i64: 8, 128>}]} {
    %c0 = arith.constant 0 : index
    %c0_0 = arith.constant 0 : index
    %0 = vector.load %arg1[%c0, %c0_0] : memref<8x1024xbf16, #tpu.memory_space<vmem>>, vector<8x1024xbf16>
    %c0_1 = arith.constant 0 : index
    %c0_2 = arith.constant 0 : index
    %1 = vector.load %arg4[%c0_1, %c0_2] : memref<1024x256xbf16, #tpu.memory_space<vmem>>, vector<1024x256xbf16>
    %cst = arith.constant dense<0.000000e+00> : vector<8x256xf32>
    %2 = tpu.matmul %0, %1, %cst {dimension_numbers = #tpu.dot_dimension_numbers<[1], [0], [0], [1], [0, 0, 1, 1], [], []>} : vector<8x1024xbf16>, vector<1024x256xbf16>, vector<8x256xf32> -> vector<8x256xf32>
    %c0_3 = arith.constant 0 : index
    %c0_4 = arith.constant 0 : index
    %3 = vector.load %arg5[%c0_3, %c0_4] : memref<1x256xf32, #tpu.memory_space<vmem>>, vector<1x256xf32>
    %4 = vector.broadcast %3 : vector<1x256xf32> to vector<8x256xf32>
    %5 = arith.addf %2, %4 : vector<8x256xf32>
    %cst_5 = arith.constant 0.000000e+00 : f32
    %6 = vector.broadcast %cst_5 : f32 to vector<8x256xf32>
    %7 = arith.maximumf %5, %6 : vector<8x256xf32>
    %8 = vector.extract_strided_slice %7 {offsets = [0, 0], sizes = [8, 128], strides = [1, 1]} : vector<8x256xf32> to vector<8x128xf32>
    %c0_6 = arith.constant 0 : index
    %c0_7 = arith.constant 0 : index
    %9 = vector.load %arg2[%c0_6, %c0_7] : memref<1x128xf32, #tpu.memory_space<vmem>>, vector<1x128xf32>
    %10 = vector.broadcast %9 : vector<1x128xf32> to vector<8x128xf32>
    %11 = arith.mulf %8, %10 : vector<8x128xf32>
    %12 = arith.truncf %11 : vector<8x128xf32> to vector<8x128xbf16>
    %c0_8 = arith.constant 0 : index
    %c0_9 = arith.constant 0 : index
    %13 = vector.load %arg6[%c0_8, %c0_9] : memref<128x256xbf16, #tpu.memory_space<vmem>>, vector<128x256xbf16>
    %cst_10 = arith.constant dense<0.000000e+00> : vector<8x256xf32>
    %14 = tpu.matmul %12, %13, %cst_10 {dimension_numbers = #tpu.dot_dimension_numbers<[1], [0], [0], [1], [0, 0, 1, 1], [], []>} : vector<8x128xbf16>, vector<128x256xbf16>, vector<8x256xf32> -> vector<8x256xf32>
    %c0_11 = arith.constant 0 : index
    %c0_12 = arith.constant 0 : index
    %15 = vector.load %arg7[%c0_11, %c0_12] : memref<1x256xf32, #tpu.memory_space<vmem>>, vector<1x256xf32>
    %16 = vector.broadcast %15 : vector<1x256xf32> to vector<8x256xf32>
    %17 = arith.addf %14, %16 : vector<8x256xf32>
    %cst_13 = arith.constant dense<0.000000e+00> : vector<8xf32>
    %18 = vector.multi_reduction <add>, %17, %cst_13 [1] : vector<8x256xf32> to vector<8xf32>
    %19 = vector.shape_cast %18 : vector<8xf32> to vector<8x1xf32>
    %cst_14 = arith.constant 2.560000e+02 : f32
    %20 = vector.broadcast %cst_14 : f32 to vector<8x1xf32>
    %21 = arith.divf %19, %20 : vector<8x1xf32>
    %22 = vector.broadcast %21 : vector<8x1xf32> to vector<8x256xf32>
    %23 = arith.subf %17, %22 : vector<8x256xf32>
    %24 = arith.mulf %23, %23 : vector<8x256xf32>
    %cst_15 = arith.constant dense<0.000000e+00> : vector<8xf32>
    %25 = vector.multi_reduction <add>, %24, %cst_15 [1] : vector<8x256xf32> to vector<8xf32>
    %26 = vector.shape_cast %25 : vector<8xf32> to vector<8x1xf32>
    %cst_16 = arith.constant 2.560000e+02 : f32
    %27 = vector.broadcast %cst_16 : f32 to vector<8x1xf32>
    %28 = arith.divf %26, %27 : vector<8x1xf32>
    %29 = vector.broadcast %21 : vector<8x1xf32> to vector<8x256xf32>
    %30 = arith.subf %17, %29 : vector<8x256xf32>
    %cst_17 = arith.constant 9.99999974E-6 : f32
    %31 = vector.broadcast %cst_17 : f32 to vector<8x1xf32>
    %32 = arith.addf %28, %31 : vector<8x1xf32>
    %33 = math.rsqrt %32 : vector<8x1xf32>
    %34 = vector.broadcast %33 : vector<8x1xf32> to vector<8x256xf32>
    %35 = arith.mulf %30, %34 : vector<8x256xf32>
    %c0_18 = arith.constant 0 : index
    %c0_19 = arith.constant 0 : index
    %36 = vector.load %arg8[%c0_18, %c0_19] : memref<1x256xf32, #tpu.memory_space<vmem>>, vector<1x256xf32>
    %37 = vector.broadcast %36 : vector<1x256xf32> to vector<8x256xf32>
    %38 = arith.mulf %35, %37 : vector<8x256xf32>
    %c0_20 = arith.constant 0 : index
    %c0_21 = arith.constant 0 : index
    %39 = vector.load %arg9[%c0_20, %c0_21] : memref<1x256xf32, #tpu.memory_space<vmem>>, vector<1x256xf32>
    %40 = vector.broadcast %39 : vector<1x256xf32> to vector<8x256xf32>
    %41 = arith.addf %38, %40 : vector<8x256xf32>
    %cst_22 = arith.constant 0.000000e+00 : f32
    %42 = vector.broadcast %cst_22 : f32 to vector<8x256xf32>
    %43 = arith.maximumf %41, %42 : vector<8x256xf32>
    %c0_23 = arith.constant 0 : index
    %c0_24 = arith.constant 0 : index
    %44 = vector.load %arg3[%c0_23, %c0_24] : memref<8x256xf32, #tpu.memory_space<vmem>>, vector<8x256xf32>
    %45 = arith.addf %43, %44 : vector<8x256xf32>
    %cst_25 = arith.constant 1.000000e+00 : f32
    %46 = vector.broadcast %cst_25 : f32 to vector<8x256xf32>
    %47 = arith.mulf %45, %46 : vector<8x256xf32>
    %48 = vector.extract_strided_slice %47 {offsets = [0, 0], sizes = [8, 128], strides = [1, 1]} : vector<8x256xf32> to vector<8x128xf32>
    %49 = vector.extract_strided_slice %47 {offsets = [0, 128], sizes = [8, 128], strides = [1, 1]} : vector<8x256xf32> to vector<8x128xf32>
    %50 = arith.maximumf %48, %49 : vector<8x128xf32>
    %51 = arith.subf %48, %50 : vector<8x128xf32>
    %52 = math.exp %51 : vector<8x128xf32>
    %53 = arith.subf %49, %50 : vector<8x128xf32>
    %54 = math.exp %53 : vector<8x128xf32>
    %55 = arith.addf %52, %54 : vector<8x128xf32>
    %56 = tpu.reciprocal %55 {approx = true} : vector<8x128xf32> -> vector<8x128xf32>
    %57 = arith.mulf %52, %56 : vector<8x128xf32>
    %58 = arith.mulf %54, %56 : vector<8x128xf32>
    %59 = arith.mulf %8, %57 : vector<8x128xf32>
    %60 = arith.mulf %8, %58 : vector<8x128xf32>
    %61 = tpu.concatenate %59, %60 in 1 : vector<8x128xf32>, vector<8x128xf32> -> vector<8x256xf32>
    %62 = arith.truncf %61 : vector<8x256xf32> to vector<8x256xbf16>
    %c0_26 = arith.constant 0 : index
    %c0_27 = arith.constant 0 : index
    %63 = vector.load %arg10[%c0_26, %c0_27] : memref<256x128xbf16, #tpu.memory_space<vmem>>, vector<256x128xbf16>
    %cst_28 = arith.constant dense<0.000000e+00> : vector<8x128xf32>
    %64 = tpu.matmul %62, %63, %cst_28 {dimension_numbers = #tpu.dot_dimension_numbers<[1], [0], [0], [1], [0, 0, 1, 1], [], []>} : vector<8x256xbf16>, vector<256x128xbf16>, vector<8x128xf32> -> vector<8x128xf32>
    %c0_29 = arith.constant 0 : index
    %c0_30 = arith.constant 0 : index
    %65 = vector.load %arg11[%c0_29, %c0_30] : memref<1x128xf32, #tpu.memory_space<vmem>>, vector<1x128xf32>
    %66 = vector.broadcast %65 : vector<1x128xf32> to vector<8x128xf32>
    %67 = arith.addf %64, %66 : vector<8x128xf32>
    %c0_31 = arith.constant 0 : index
    %c0_32 = arith.constant 0 : index
    %68 = vector.load %arg12[%c0_31, %c0_32] : memref<8x128xf32, #tpu.memory_space<vmem>>, vector<8x128xf32>
    tpu.vector_store %arg12[%c0_31, %c0_32], %67 {strides = array<i32>} : memref<8x128xf32, #tpu.memory_space<vmem>>, vector<8x128xf32>,
    %c0_33 = arith.constant 0 : index
    %c0_34 = arith.constant 0 : index
    %69 = vector.load %arg13[%c0_33, %c0_34] : memref<8x128xf32, #tpu.memory_space<vmem>>, vector<8x128xf32>
    tpu.vector_store %arg13[%c0_33, %c0_34], %8 {strides = array<i32>} : memref<8x128xf32, #tpu.memory_space<vmem>>, vector<8x128xf32>,
    %70 = vector.extract_strided_slice %7 {offsets = [0, 128], sizes = [8, 128], strides = [1, 1]} : vector<8x256xf32> to vector<8x128xf32>
    %c0_35 = arith.constant 0 : index
    %c0_36 = arith.constant 0 : index
    %71 = vector.load %arg14[%c0_35, %c0_36] : memref<8x128xf32, #tpu.memory_space<vmem>>, vector<8x128xf32>
    tpu.vector_store %arg14[%c0_35, %c0_36], %70 {strides = array<i32>} : memref<8x128xf32, #tpu.memory_space<vmem>>, vector<8x128xf32>,
    return
  }
  func.func @transform_0(%arg0: i32) -> (i32, i32) {
    %c0_i32 = arith.constant 0 : i32
    %c0_i32_0 = arith.constant 0 : i32
    %c0_i32_1 = arith.constant 0 : i32
    return %c0_i32, %c0_i32_0 : i32, i32
  }
  func.func @transform_1(%arg0: i32) -> (i32, i32) {
    %c0_i32 = arith.constant 0 : i32
    %c0_i32_0 = arith.constant 0 : i32
    %c0_i32_1 = arith.constant 0 : i32
    return %c0_i32, %c0_i32_0 : i32, i32
  }
  func.func @transform_2(%arg0: i32) -> (i32, i32) {
    %c0_i32 = arith.constant 0 : i32
    %c0_i32_0 = arith.constant 0 : i32
    %c0_i32_1 = arith.constant 0 : i32
    return %c0_i32, %c0_i32_0 : i32, i32
  }
  func.func @transform_3(%arg0: i32) -> (i32, i32) {
    %c0_i32 = arith.constant 0 : i32
    %c0_i32_0 = arith.constant 0 : i32
    %c0_i32_1 = arith.constant 0 : i32
    return %c0_i32, %c0_i32_0 : i32, i32
  }
  func.func @transform_4(%arg0: i32) -> (i32, i32) {
    %c0_i32 = arith.constant 0 : i32
    %c0_i32_0 = arith.constant 0 : i32
    %c0_i32_1 = arith.constant 0 : i32
    return %c0_i32, %c0_i32_0 : i32, i32
  }
  func.func @transform_5(%arg0: i32) -> (i32, i32) {
    %c0_i32 = arith.constant 0 : i32
    %c0_i32_0 = arith.constant 0 : i32
    %c0_i32_1 = arith.constant 0 : i32
    return %c0_i32, %c0_i32_0 : i32, i32
  }
  func.func @transform_6(%arg0: i32) -> (i32, i32) {
    %c0_i32 = arith.constant 0 : i32
    %c0_i32_0 = arith.constant 0 : i32
    %c0_i32_1 = arith.constant 0 : i32
    return %c0_i32, %c0_i32_0 : i32, i32
  }
  func.func @transform_7(%arg0: i32) -> (i32, i32) {
    %c0_i32 = arith.constant 0 : i32
    %c0_i32_0 = arith.constant 0 : i32
    %c0_i32_1 = arith.constant 0 : i32
    return %c0_i32, %c0_i32_0 : i32, i32
  }
  func.func @transform_8(%arg0: i32) -> (i32, i32) {
    %c0_i32 = arith.constant 0 : i32
    %c0_i32_0 = arith.constant 0 : i32
    %c0_i32_1 = arith.constant 0 : i32
    return %c0_i32, %c0_i32_0 : i32, i32
  }
  func.func @transform_9(%arg0: i32) -> (i32, i32) {
    %c0_i32 = arith.constant 0 : i32
    %c0_i32_0 = arith.constant 0 : i32
    %c0_i32_1 = arith.constant 0 : i32
    return %c0_i32, %c0_i32_0 : i32, i32
  }
  func.func @transform_10(%arg0: i32) -> (i32, i32) {
    %c0_i32 = arith.constant 0 : i32
    %c0_i32_0 = arith.constant 0 : i32
    %c0_i32_1 = arith.constant 0 : i32
    return %c0_i32, %c0_i32_0 : i32, i32
  }
  func.func @transform_11(%arg0: i32) -> (i32, i32) {
    %c0_i32 = arith.constant 0 : i32
    %c0_i32_0 = arith.constant 0 : i32
    %c0_i32_1 = arith.constant 0 : i32
    return %c0_i32, %c0_i32_0 : i32, i32
  }
  func.func @transform_12(%arg0: i32) -> (i32, i32) {
    %c0_i32 = arith.constant 0 : i32
    %c0_i32_0 = arith.constant 0 : i32
    %c0_i32_1 = arith.constant 0 : i32
    return %c0_i32, %c0_i32_0 : i32, i32
  }
  func.func @transform_13(%arg0: i32) -> (i32, i32) {
    %c0_i32 = arith.constant 0 : i32
    %c0_i32_0 = arith.constant 0 : i32
    %c0_i32_1 = arith.constant 0 : i32
    return %c0_i32, %c0_i32_0 : i32, i32
  }
}

</mosaic_0001>

<llo_original>
// kernel: tpu_custom_call.1
$region0: #{tpu_custom_call.1}
  #allocation0 [shape = 'u32[]', space=smem, size = 0x4, offset = 0x4, fixed_abs, tag = 'smem constant byte address 0x4 - core index']
  #allocation1 [shape = 'u32[72,128]{1,0:T(1,128)}', space=vmem, size = 0x9000, scoped, tag = 'internal scratch']
  %s0 = inlined_call_operand.hbm [shape: bf16[8,1024], index: 0, kind: input, shape index: {}]
  %s1 = inlined_call_operand.hbm [shape: f32[1,128], index: 1, kind: input, shape index: {}]
  %s2 = inlined_call_operand.hbm [shape: f32[8,256], index: 2, kind: input, shape index: {}]
  %s3 = inlined_call_operand.hbm [shape: bf16[1024,256], index: 3, kind: input, shape index: {}]
  %s4 = inlined_call_operand.vmem [shape: f32[1,256], index: 4, kind: input, shape index: {}]
  %s5 = inlined_call_operand.hbm [shape: bf16[128,256], index: 5, kind: input, shape index: {}]
  %s6 = inlined_call_operand.vmem [shape: f32[1,256], index: 6, kind: input, shape index: {}]
  %s7 = inlined_call_operand.vmem [shape: f32[1,256], index: 7, kind: input, shape index: {}]
  %s8 = inlined_call_operand.hbm [shape: f32[1,256], index: 8, kind: input, shape index: {}]
  %s9 = inlined_call_operand.hbm [shape: bf16[256,128], index: 9, kind: input, shape index: {}]
  %s10 = inlined_call_operand.vmem [shape: f32[1,128], index: 10, kind: input, shape index: {}]
  %s11 = inlined_call_operand.hbm [shape: f32[8,128], index: 11, kind: output, shape index: {0}]
  %s12 = inlined_call_operand.hbm [shape: f32[8,128], index: 12, kind: output, shape index: {1}]
  %s13 = inlined_call_operand.hbm [shape: f32[8,128], index: 13, kind: output, shape index: {2}]
  %14 = xla_tuple %s11, %s12, %s13
  %s15 = sld [smem:[#allocation0]]
  $region98: #{tpu_custom_call.1} parent=0
    _
  %s17 = ssub.s32 1, %s15
  %s18 = scalar_select 0, %s17, %s15
  $region1: #{tpu_custom_call.1} parent=0
    #allocation2 [shape = 'u8[16384]{0}', space=vmem, size = 0x4000, scoped, tag = 'input window, operand 0, single buffered']
    #allocation3 [shape = 's32[1]{0}', space=sflag, size = 0x4, scoped, tag = 'scoped memory for tpu_custom_call.1']
    #allocation4 [shape = 's32[1]{0}', space=sflag, size = 0x4, scoped, tag = 'scoped memory for tpu_custom_call.1']
    #allocation5 [shape = 'u8[512]{0}', space=vmem, size = 0x400, scoped, tag = 'input window, operand 1, single buffered']
    #allocation6 [shape = 's32[1]{0}', space=sflag, size = 0x4, scoped, tag = 'scoped memory for tpu_custom_call.1']
    #allocation7 [shape = 'u8[8192]{0}', space=vmem, size = 0x2000, scoped, tag = 'input window, operand 2, single buffered']
    #allocation8 [shape = 'u8[524288]{0}', space=vmem, size = 0x80000, scoped, tag = 'input window, operand 3, single buffered']
    #allocation9 [shape = 's32[1]{0}', space=sflag, size = 0x4, scoped, tag = 'scoped memory for tpu_custom_call.1']
    #allocation10 [shape = 'u8[65536]{0}', space=vmem, size = 0x10000, scoped, tag = 'input window, operand 5, single buffered']
    #allocation11 [shape = 'u8[1024]{0}', space=vmem, size = 0x400, scoped, tag = 'input window, operand 8, single buffered']
    #allocation12 [shape = 's32[1]{0}', space=sflag, size = 0x4, scoped, tag = 'scoped memory for tpu_custom_call.1']
    #allocation13 [shape = 'u8[65536]{0}', space=vmem, size = 0x10000, scoped, tag = 'input window, operand 9, single buffered']
    #allocation14 [shape = 'u8[4096]{0}', space=vmem, size = 0x1000, scoped, tag = 'output window, operand 0, single buffered']
    #allocation15 [shape = 'u8[4096]{0}', space=vmem, size = 0x1000, scoped, tag = 'output window, operand 1, single buffered']
    #allocation16 [shape = 's32[1]{0}', space=sflag, size = 0x4, scoped, tag = 'scoped memory for tpu_custom_call.1']
    #allocation17 [shape = 'u8[4096]{0}', space=vmem, size = 0x1000, scoped, tag = 'output window, operand 2, single buffered']
    %19 = vsyncpa [#allocation3], 0
    %20 = vsyncpa [#allocation6], 0
    %21 = vsyncpa [#allocation9], 0
    %22 = vsyncpa [#allocation12], 0
    %23 = vsyncpa [#allocation4], 0
    %24 = vsyncpa [#allocation16], 0
    // Predicated region
    $region2: #{tpu_custom_call.1} parent=1 // pred_check
      _
    $region3: #{tpu_custom_call.1} parent=1 // pred_check_branch
      %26 = sbr.rel (0) target = $region5
    $region4: #{tpu_custom_call.1} parent=1 // pred_region
      %28 = vsyncadd [#allocation3], 0
      %s30 = sshll.u32 %s0, 4
      %s31 = int_to_ptr.hbm [resolvable:$true] %s30
      %s32 = sshll.u32 [#allocation2], 4
      %s33 = int_to_ptr.vmem [resolvable:$true] %s32
      %35 = dma.hbm_to_vmem [thread:$0]  %s31, 512, %s33, [#allocation3]
    $region5: #{tpu_custom_call.1} parent=1 // pred_fallthru
      _
    // Predicated region
    $region6: #{tpu_custom_call.1} parent=1 // pred_check
      _
    $region7: #{tpu_custom_call.1} parent=1 // pred_check_branch
      %37 = sbr.rel (0) target = $region9
    $region8: #{tpu_custom_call.1} parent=1 // pred_region
      %39 = vsyncadd [#allocation6], 0
      %s41 = sshll.u32 %s1, 4
      %s42 = int_to_ptr.hbm [resolvable:$true] %s41
      %s43 = sshll.u32 [#allocation5], 4
      %s44 = int_to_ptr.vmem [resolvable:$true] %s43
      %46 = dma.hbm_to_vmem [thread:$0]  %s42, 16, %s44, [#allocation6]
    $region9: #{tpu_custom_call.1} parent=1 // pred_fallthru
      _
    // Predicated region
    $region10: #{tpu_custom_call.1} parent=1 // pred_check
      _
    $region11: #{tpu_custom_call.1} parent=1 // pred_check_branch
      %48 = sbr.rel (0) target = $region13
    $region12: #{tpu_custom_call.1} parent=1 // pred_region
      %50 = vsyncadd [#allocation6], 0
      %s52 = sshll.u32 %s2, 4
      %s53 = int_to_ptr.hbm [resolvable:$true] %s52
      %s54 = sshll.u32 [#allocation7], 4
      %s55 = int_to_ptr.vmem [resolvable:$true] %s54
      %57 = dma.hbm_to_vmem [thread:$0]  %s53, 256, %s55, [#allocation6]
    $region13: #{tpu_custom_call.1} parent=1 // pred_fallthru
      _
    // Predicated region
    $region14: #{tpu_custom_call.1} parent=1 // pred_check
      _
    $region15: #{tpu_custom_call.1} parent=1 // pred_check_branch
      %59 = sbr.rel (0) target = $region17
    $region16: #{tpu_custom_call.1} parent=1 // pred_region
      %61 = vsyncadd [#allocation9], 0
      %s62 = sshll.u32 %s3, 4
      %s63 = int_to_ptr.hbm [resolvable:$true] %s62
      %s64 = sshll.u32 [#allocation8], 4
      %s65 = int_to_ptr.vmem [resolvable:$true] %s64
      %70 = dma.hbm_to_vmem [thread:$0]  %s63, 16384, %s65, [#allocation9], 128, 128, 8
    $region17: #{tpu_custom_call.1} parent=1 // pred_fallthru
      _
    // Predicated region
    $region18: #{tpu_custom_call.1} parent=1 // pred_check
      _
    $region19: #{tpu_custom_call.1} parent=1 // pred_check_branch
      %72 = sbr.rel (0) target = $region21
    $region20: #{tpu_custom_call.1} parent=1 // pred_region
      _
    $region21: #{tpu_custom_call.1} parent=1 // pred_fallthru
      _
    // Predicated region
    $region22: #{tpu_custom_call.1} parent=1 // pred_check
      _
    $region23: #{tpu_custom_call.1} parent=1 // pred_check_branch
      %74 = sbr.rel (0) target = $region25
    $region24: #{tpu_custom_call.1} parent=1 // pred_region
      %76 = vsyncadd [#allocation9], 0
      %s77 = sshll.u32 %s5, 4
      %s78 = int_to_ptr.hbm [resolvable:$true] %s77
      %s79 = sshll.u32 [#allocation10], 4
      %s80 = int_to_ptr.vmem [resolvable:$true] %s79
      %85 = dma.hbm_to_vmem [thread:$0]  %s78, 2048, %s80, [#allocation9], 128, 128, 8
    $region25: #{tpu_custom_call.1} parent=1 // pred_fallthru
      _
    // Predicated region
    $region26: #{tpu_custom_call.1} parent=1 // pred_check
      _
    $region27: #{tpu_custom_call.1} parent=1 // pred_check_branch
      %87 = sbr.rel (0) target = $region29
    $region28: #{tpu_custom_call.1} parent=1 // pred_region
      _
    $region29: #{tpu_custom_call.1} parent=1 // pred_fallthru
      _
    // Predicated region
    $region30: #{tpu_custom_call.1} parent=1 // pred_check
      _
    $region31: #{tpu_custom_call.1} parent=1 // pred_check_branch
      %89 = sbr.rel (0) target = $region33
    $region32: #{tpu_custom_call.1} parent=1 // pred_region
      _
    $region33: #{tpu_custom_call.1} parent=1 // pred_fallthru
      _
    // Predicated region
    $region34: #{tpu_custom_call.1} parent=1 // pred_check
      _
    $region35: #{tpu_custom_call.1} parent=1 // pred_check_branch
      %91 = sbr.rel (0) target = $region37
    $region36: #{tpu_custom_call.1} parent=1 // pred_region
      %93 = vsyncadd [#allocation12], 0
      %s95 = sshll.u32 %s8, 4
      %s96 = int_to_ptr.hbm [resolvable:$true] %s95
      %s97 = sshll.u32 [#allocation11], 4
      %s98 = int_to_ptr.vmem [resolvable:$true] %s97
      %100 = dma.hbm_to_vmem [thread:$0]  %s96, 32, %s98, [#allocation12]
    $region37: #{tpu_custom_call.1} parent=1 // pred_fallthru
      _
    // Predicated region
    $region38: #{tpu_custom_call.1} parent=1 // pred_check
      _
    $region39: #{tpu_custom_call.1} parent=1 // pred_check_branch
      %102 = sbr.rel (0) target = $region41
    $region40: #{tpu_custom_call.1} parent=1 // pred_region
      %104 = vsyncadd [#allocation12], 0
      %s105 = sshll.u32 %s9, 4
      %s106 = int_to_ptr.hbm [resolvable:$true] %s105
      %s107 = sshll.u32 [#allocation13], 4
      %s108 = int_to_ptr.vmem [resolvable:$true] %s107
      %113 = dma.hbm_to_vmem [thread:$0]  %s106, 2048, %s108, [#allocation12], 64, 64, 4
    $region41: #{tpu_custom_call.1} parent=1 // pred_fallthru
      _
    // Predicated region
    $region42: #{tpu_custom_call.1} parent=1 // pred_check
      _
    $region43: #{tpu_custom_call.1} parent=1 // pred_check_branch
      %115 = sbr.rel (0) target = $region45
    $region44: #{tpu_custom_call.1} parent=1 // pred_region
      _
    $region45: #{tpu_custom_call.1} parent=1 // pred_fallthru
      _
    // Predicated region
    $region46: #{tpu_custom_call.1} parent=1 // pred_check
      _
    $region47: #{tpu_custom_call.1} parent=1 // pred_check_branch
      %117 = sbr.rel (0) target = $region49
    $region48: #{tpu_custom_call.1} parent=1 // pred_region
      %119 = dma.done [#allocation3], 512
    $region49: #{tpu_custom_call.1} parent=1 // pred_fallthru
      _
    // Predicated region
    $region50: #{tpu_custom_call.1} parent=1 // pred_check
      _
    $region51: #{tpu_custom_call.1} parent=1 // pred_check_branch
      %121 = sbr.rel (0) target = $region53
    $region52: #{tpu_custom_call.1} parent=1 // pred_region
      %123 = dma.done [#allocation6], 16
    $region53: #{tpu_custom_call.1} parent=1 // pred_fallthru
      _
    // Predicated region
    $region54: #{tpu_custom_call.1} parent=1 // pred_check
      _
    $region55: #{tpu_custom_call.1} parent=1 // pred_check_branch
      %125 = sbr.rel (0) target = $region57
    $region56: #{tpu_custom_call.1} parent=1 // pred_region
      %127 = dma.done [#allocation6], 256
    $region57: #{tpu_custom_call.1} parent=1 // pred_fallthru
      _
    // Predicated region
    $region58: #{tpu_custom_call.1} parent=1 // pred_check
      _
    $region59: #{tpu_custom_call.1} parent=1 // pred_check_branch
      %129 = sbr.rel (0) target = $region61
    $region60: #{tpu_custom_call.1} parent=1 // pred_region
      %131 = dma.done [#allocation9], 16384
    $region61: #{tpu_custom_call.1} parent=1 // pred_fallthru
      _
    // Predicated region
    $region62: #{tpu_custom_call.1} parent=1 // pred_check
      _
    $region63: #{tpu_custom_call.1} parent=1 // pred_check_branch
      %133 = sbr.rel (0) target = $region65
    $region64: #{tpu_custom_call.1} parent=1 // pred_region
      %135 = dma.done [#allocation9], 2048
    $region65: #{tpu_custom_call.1} parent=1 // pred_fallthru
      _
    // Predicated region
    $region66: #{tpu_custom_call.1} parent=1 // pred_check
      _
    $region67: #{tpu_custom_call.1} parent=1 // pred_check_branch
      %137 = sbr.rel (0) target = $region69
    $region68: #{tpu_custom_call.1} parent=1 // pred_region
      %139 = dma.done [#allocation12], 32
    $region69: #{tpu_custom_call.1} parent=1 // pred_fallthru
      _
    // Predicated region
    $region70: #{tpu_custom_call.1} parent=1 // pred_check
      _
    $region71: #{tpu_custom_call.1} parent=1 // pred_check_branch
      %141 = sbr.rel (0) target = $region73
    $region72: #{tpu_custom_call.1} parent=1 // pred_region
      %143 = dma.done [#allocation12], 2048
    $region73: #{tpu_custom_call.1} parent=1 // pred_fallthru
      _
    %v144 = vld [vmem:[#allocation2] sm:$0xff]
    %v145 = vld [vmem:[#allocation2 + $0x8] sm:$0xff]
    %v146 = vld [vmem:[#allocation2 + $0x10] sm:$0xff]
    %v147 = vld [vmem:[#allocation2 + $0x18] sm:$0xff]
    %v148 = vld [vmem:[#allocation8] sm:$0xff]
    %v149 = vld [vmem:[#allocation8 + $0x8] sm:$0xff]
    %v150 = vld [vmem:[#allocation8 + $0x10] sm:$0xff]
    %v151 = vld [vmem:[#allocation8 + $0x18] sm:$0xff]
    %v152 = vld [vmem:[#allocation8 + $0x20] sm:$0xff]
    %v153 = vld [vmem:[#allocation8 + $0x28] sm:$0xff]
    %v154 = vld [vmem:[#allocation8 + $0x30] sm:$0xff]
    %v155 = vld [vmem:[#allocation8 + $0x38] sm:$0xff]
    %v156 = vld [vmem:[#allocation8 + $0x40] sm:$0xff]
    %v157 = vld [vmem:[#allocation8 + $0x48] sm:$0xff]
    %v158 = vld [vmem:[#allocation8 + $0x50] sm:$0xff]
    %v159 = vld [vmem:[#allocation8 + $0x58] sm:$0xff]
    %v160 = vld [vmem:[#allocation8 + $0x60] sm:$0xff]
    %v161 = vld [vmem:[#allocation8 + $0x68] sm:$0xff]
    %v162 = vld [vmem:[#allocation8 + $0x70] sm:$0xff]
    %v163 = vld [vmem:[#allocation8 + $0x78] sm:$0xff]
    %v164 = vld [vmem:[#allocation8 + $0x80] sm:$0xff]
    %v165 = vld [vmem:[#allocation8 + $0x88] sm:$0xff]
    %v166 = vld [vmem:[#allocation8 + $0x90] sm:$0xff]
    %v167 = vld [vmem:[#allocation8 + $0x98] sm:$0xff]
    %v168 = vld [vmem:[#allocation8 + $0xa0] sm:$0xff]
    %v169 = vld [vmem:[#allocation8 + $0xa8] sm:$0xff]
    %v170 = vld [vmem:[#allocation8 + $0xb0] sm:$0xff]
    %v171 = vld [vmem:[#allocation8 + $0xb8] sm:$0xff]
    %v172 = vld [vmem:[#allocation8 + $0xc0] sm:$0xff]
    %v173 = vld [vmem:[#allocation8 + $0xc8] sm:$0xff]
    %v174 = vld [vmem:[#allocation8 + $0xd0] sm:$0xff]
    %v175 = vld [vmem:[#allocation8 + $0xd8] sm:$0xff]
    %v176 = vld [vmem:[#allocation8 + $0xe0] sm:$0xff]
    %v177 = vld [vmem:[#allocation8 + $0xe8] sm:$0xff]
    %v178 = vld [vmem:[#allocation8 + $0xf0] sm:$0xff]
    %v179 = vld [vmem:[#allocation8 + $0xf8] sm:$0xff]
    %v180 = vld [vmem:[#allocation8 + $0x100] sm:$0xff]
    %v181 = vld [vmem:[#allocation8 + $0x108] sm:$0xff]
    %v182 = vld [vmem:[#allocation8 + $0x110] sm:$0xff]
    %v183 = vld [vmem:[#allocation8 + $0x118] sm:$0xff]
    %v184 = vld [vmem:[#allocation8 + $0x120] sm:$0xff]
    %v185 = vld [vmem:[#allocation8 + $0x128] sm:$0xff]
    %v186 = vld [vmem:[#allocation8 + $0x130] sm:$0xff]
    %v187 = vld [vmem:[#allocation8 + $0x138] sm:$0xff]
    %v188 = vld [vmem:[#allocation8 + $0x140] sm:$0xff]
    %v189 = vld [vmem:[#allocation8 + $0x148] sm:$0xff]
    %v190 = vld [vmem:[#allocation8 + $0x150] sm:$0xff]
    %v191 = vld [vmem:[#allocation8 + $0x158] sm:$0xff]
    %v192 = vld [vmem:[#allocation8 + $0x160] sm:$0xff]
    %v193 = vld [vmem:[#allocation8 + $0x168] sm:$0xff]
    %v194 = vld [vmem:[#allocation8 + $0x170] sm:$0xff]
    %v195 = vld [vmem:[#allocation8 + $0x178] sm:$0xff]
    %v196 = vld [vmem:[#allocation8 + $0x180] sm:$0xff]
    %v197 = vld [vmem:[#allocation8 + $0x188] sm:$0xff]
    %v198 = vld [vmem:[#allocation8 + $0x190] sm:$0xff]
    %v199 = vld [vmem:[#allocation8 + $0x198] sm:$0xff]
    %v200 = vld [vmem:[#allocation8 + $0x1a0] sm:$0xff]
    %v201 = vld [vmem:[#allocation8 + $0x1a8] sm:$0xff]
    %v202 = vld [vmem:[#allocation8 + $0x1b0] sm:$0xff]
    %v203 = vld [vmem:[#allocation8 + $0x1b8] sm:$0xff]
    %v204 = vld [vmem:[#allocation8 + $0x1c0] sm:$0xff]
    %v205 = vld [vmem:[#allocation8 + $0x1c8] sm:$0xff]
    %v206 = vld [vmem:[#allocation8 + $0x1d0] sm:$0xff]
    %v207 = vld [vmem:[#allocation8 + $0x1d8] sm:$0xff]
    %v208 = vld [vmem:[#allocation8 + $0x1e0] sm:$0xff]
    %v209 = vld [vmem:[#allocation8 + $0x1e8] sm:$0xff]
    %v210 = vld [vmem:[#allocation8 + $0x1f0] sm:$0xff]
    %v211 = vld [vmem:[#allocation8 + $0x1f8] sm:$0xff]
    %v212 = vld [vmem:[#allocation8 + $0x200] sm:$0xff]
    %v213 = vld [vmem:[#allocation8 + $0x208] sm:$0xff]
    %v214 = vld [vmem:[#allocation8 + $0x210] sm:$0xff]
    %v215 = vld [vmem:[#allocation8 + $0x218] sm:$0xff]
    %v216 = vld [vmem:[#allocation8 + $0x220] sm:$0xff]
    %v217 = vld [vmem:[#allocation8 + $0x228] sm:$0xff]
    %v218 = vld [vmem:[#allocation8 + $0x230] sm:$0xff]
    %v219 = vld [vmem:[#allocation8 + $0x238] sm:$0xff]
    %v220 = vld [vmem:[#allocation8 + $0x240] sm:$0xff]
    %v221 = vld [vmem:[#allocation8 + $0x248] sm:$0xff]
    %v222 = vld [vmem:[#allocation8 + $0x250] sm:$0xff]
    %v223 = vld [vmem:[#allocation8 + $0x258] sm:$0xff]
    %v224 = vld [vmem:[#allocation8 + $0x260] sm:$0xff]
    %v225 = vld [vmem:[#allocation8 + $0x268] sm:$0xff]
    %v226 = vld [vmem:[#allocation8 + $0x270] sm:$0xff]
    %v227 = vld [vmem:[#allocation8 + $0x278] sm:$0xff]
    %v228 = vld [vmem:[#allocation8 + $0x280] sm:$0xff]
    %v229 = vld [vmem:[#allocation8 + $0x288] sm:$0xff]
    %v230 = vld [vmem:[#allocation8 + $0x290] sm:$0xff]
    %v231 = vld [vmem:[#allocation8 + $0x298] sm:$0xff]
    %v232 = vld [vmem:[#allocation8 + $0x2a0] sm:$0xff]
    %v233 = vld [vmem:[#allocation8 + $0x2a8] sm:$0xff]
    %v234 = vld [vmem:[#allocation8 + $0x2b0] sm:$0xff]
    %v235 = vld [vmem:[#allocation8 + $0x2b8] sm:$0xff]
    %v236 = vld [vmem:[#allocation8 + $0x2c0] sm:$0xff]
    %v237 = vld [vmem:[#allocation8 + $0x2c8] sm:$0xff]
    %v238 = vld [vmem:[#allocation8 + $0x2d0] sm:$0xff]
    %v239 = vld [vmem:[#allocation8 + $0x2d8] sm:$0xff]
    %v240 = vld [vmem:[#allocation8 + $0x2e0] sm:$0xff]
    %v241 = vld [vmem:[#allocation8 + $0x2e8] sm:$0xff]
    %v242 = vld [vmem:[#allocation8 + $0x2f0] sm:$0xff]
    %v243 = vld [vmem:[#allocation8 + $0x2f8] sm:$0xff]
    %v244 = vld [vmem:[#allocation8 + $0x300] sm:$0xff]
    %v245 = vld [vmem:[#allocation8 + $0x308] sm:$0xff]
    %v246 = vld [vmem:[#allocation8 + $0x310] sm:$0xff]
    %v247 = vld [vmem:[#allocation8 + $0x318] sm:$0xff]
    %v248 = vld [vmem:[#allocation8 + $0x320] sm:$0xff]
    %v249 = vld [vmem:[#allocation8 + $0x328] sm:$0xff]
    %v250 = vld [vmem:[#allocation8 + $0x330] sm:$0xff]
    %v251 = vld [vmem:[#allocation8 + $0x338] sm:$0xff]
    %v252 = vld [vmem:[#allocation8 + $0x340] sm:$0xff]
    %v253 = vld [vmem:[#allocation8 + $0x348] sm:$0xff]
    %v254 = vld [vmem:[#allocation8 + $0x350] sm:$0xff]
    %v255 = vld [vmem:[#allocation8 + $0x358] sm:$0xff]
    %v256 = vld [vmem:[#allocation8 + $0x360] sm:$0xff]
    %v257 = vld [vmem:[#allocation8 + $0x368] sm:$0xff]
    %v258 = vld [vmem:[#allocation8 + $0x370] sm:$0xff]
    %v259 = vld [vmem:[#allocation8 + $0x378] sm:$0xff]
    %v260 = vld [vmem:[#allocation8 + $0x380] sm:$0xff]
    %v261 = vld [vmem:[#allocation8 + $0x388] sm:$0xff]
    %v262 = vld [vmem:[#allocation8 + $0x390] sm:$0xff]
    %v263 = vld [vmem:[#allocation8 + $0x398] sm:$0xff]
    %v264 = vld [vmem:[#allocation8 + $0x3a0] sm:$0xff]
    %v265 = vld [vmem:[#allocation8 + $0x3a8] sm:$0xff]
    %v266 = vld [vmem:[#allocation8 + $0x3b0] sm:$0xff]
    %v267 = vld [vmem:[#allocation8 + $0x3b8] sm:$0xff]
    %v268 = vld [vmem:[#allocation8 + $0x3c0] sm:$0xff]
    %v269 = vld [vmem:[#allocation8 + $0x3c8] sm:$0xff]
    %v270 = vld [vmem:[#allocation8 + $0x3d0] sm:$0xff]
    %v271 = vld [vmem:[#allocation8 + $0x3d8] sm:$0xff]
    %v272 = vld [vmem:[#allocation8 + $0x3e0] sm:$0xff]
    %v273 = vld [vmem:[#allocation8 + $0x3e8] sm:$0xff]
    %v274 = vld [vmem:[#allocation8 + $0x3f0] sm:$0xff]
    %v275 = vld [vmem:[#allocation8 + $0x3f8] sm:$0xff]
    %v276 = vld [vmem:[%s4] sm:$0x3]
    %v278 = vperm.slane %v276, 0
    %v279 = vperm.slane %v276, 1
    %v286 = vunpack.c.l.b16 %v144
    %v287 = vunpack.c.h.b16 %v144
    %v288 = vunpack.c.l.b16 %v145
    %v289 = vunpack.c.h.b16 %v145
    %v290 = vunpack.c.l.b16 %v146
    %v291 = vunpack.c.h.b16 %v146
    %v292 = vunpack.c.l.b16 %v147
    %v293 = vunpack.c.h.b16 %v147
    %v294 = vpack.c.b16 %v286, %v286
    %v295 = vpack.c.b16 %v287, %v287
    %v296 = vpack.c.b16 %v288, %v288
    %v297 = vpack.c.b16 %v289, %v289
    %v298 = vpack.c.b16 %v290, %v290
    %v299 = vpack.c.b16 %v291, %v291
    %v300 = vpack.c.b16 %v292, %v292
    %v301 = vpack.c.b16 %v293, %v293
    %v438 = vunpack.c.l.b16 %v148
    %v439 = vunpack.c.h.b16 %v148
    %v440 = vunpack.c.l.b16 %v149
    %v441 = vunpack.c.h.b16 %v149
    %v442 = vunpack.c.l.b16 %v150
    %v443 = vunpack.c.h.b16 %v150
    %v444 = vunpack.c.l.b16 %v151
    %v445 = vunpack.c.h.b16 %v151
    %v446 = vunpack.c.l.b16 %v152
    %v447 = vunpack.c.h.b16 %v152
    %v448 = vunpack.c.l.b16 %v153
    %v449 = vunpack.c.h.b16 %v153
    %v450 = vunpack.c.l.b16 %v154
    %v451 = vunpack.c.h.b16 %v154
    %v452 = vunpack.c.l.b16 %v155
    %v453 = vunpack.c.h.b16 %v155
    %v454 = vunpack.c.l.b16 %v156
    %v455 = vunpack.c.h.b16 %v156
    %v456 = vunpack.c.l.b16 %v157
    %v457 = vunpack.c.h.b16 %v157
    %v458 = vunpack.c.l.b16 %v158
    %v459 = vunpack.c.h.b16 %v158
    %v460 = vunpack.c.l.b16 %v159
    %v461 = vunpack.c.h.b16 %v159
    %v462 = vunpack.c.l.b16 %v160
    %v463 = vunpack.c.h.b16 %v160
    %v464 = vunpack.c.l.b16 %v161
    %v465 = vunpack.c.h.b16 %v161
    %v466 = vunpack.c.l.b16 %v162
    %v467 = vunpack.c.h.b16 %v162
    %v468 = vunpack.c.l.b16 %v163
    %v469 = vunpack.c.h.b16 %v163
    %v470 = vunpack.c.l.b16 %v164
    %v471 = vunpack.c.h.b16 %v164
    %v472 = vunpack.c.l.b16 %v165
    %v473 = vunpack.c.h.b16 %v165
    %v474 = vunpack.c.l.b16 %v166
    %v475 = vunpack.c.h.b16 %v166
    %v476 = vunpack.c.l.b16 %v167
    %v477 = vunpack.c.h.b16 %v167
    %v478 = vunpack.c.l.b16 %v168
    %v479 = vunpack.c.h.b16 %v168
    %v480 = vunpack.c.l.b16 %v169
    %v481 = vunpack.c.h.b16 %v169
    %v482 = vunpack.c.l.b16 %v170
    %v483 = vunpack.c.h.b16 %v170
    %v484 = vunpack.c.l.b16 %v171
    %v485 = vunpack.c.h.b16 %v171
    %v486 = vunpack.c.l.b16 %v172
    %v487 = vunpack.c.h.b16 %v172
    %v488 = vunpack.c.l.b16 %v173
    %v489 = vunpack.c.h.b16 %v173
    %v490 = vunpack.c.l.b16 %v174
    %v491 = vunpack.c.h.b16 %v174
    %v492 = vunpack.c.l.b16 %v175
    %v493 = vunpack.c.h.b16 %v175
    %v494 = vunpack.c.l.b16 %v176
    %v495 = vunpack.c.h.b16 %v176
    %v496 = vunpack.c.l.b16 %v177
    %v497 = vunpack.c.h.b16 %v177
    %v498 = vunpack.c.l.b16 %v178
    %v499 = vunpack.c.h.b16 %v178
    %v500 = vunpack.c.l.b16 %v179
    %v501 = vunpack.c.h.b16 %v179
    %v502 = vunpack.c.l.b16 %v180
    %v503 = vunpack.c.h.b16 %v180
    %v504 = vunpack.c.l.b16 %v181
    %v505 = vunpack.c.h.b16 %v181
    %v506 = vunpack.c.l.b16 %v182
    %v507 = vunpack.c.h.b16 %v182
    %v508 = vunpack.c.l.b16 %v183
    %v509 = vunpack.c.h.b16 %v183
    %v510 = vunpack.c.l.b16 %v184
    %v511 = vunpack.c.h.b16 %v184
    %v512 = vunpack.c.l.b16 %v185
    %v513 = vunpack.c.h.b16 %v185
    %v514 = vunpack.c.l.b16 %v186
    %v515 = vunpack.c.h.b16 %v186
    %v516 = vunpack.c.l.b16 %v187
    %v517 = vunpack.c.h.b16 %v187
    %v518 = vunpack.c.l.b16 %v188
    %v519 = vunpack.c.h.b16 %v188
    %v520 = vunpack.c.l.b16 %v189
    %v521 = vunpack.c.h.b16 %v189
    %v522 = vunpack.c.l.b16 %v190
    %v523 = vunpack.c.h.b16 %v190
    %v524 = vunpack.c.l.b16 %v191
    %v525 = vunpack.c.h.b16 %v191
    %v526 = vunpack.c.l.b16 %v192
    %v527 = vunpack.c.h.b16 %v192
    %v528 = vunpack.c.l.b16 %v193
    %v529 = vunpack.c.h.b16 %v193
    %v530 = vunpack.c.l.b16 %v194
    %v531 = vunpack.c.h.b16 %v194
    %v532 = vunpack.c.l.b16 %v195
    %v533 = vunpack.c.h.b16 %v195
    %v534 = vunpack.c.l.b16 %v196
    %v535 = vunpack.c.h.b16 %v196
    %v536 = vunpack.c.l.b16 %v197
    %v537 = vunpack.c.h.b16 %v197
    %v538 = vunpack.c.l.b16 %v198
    %v539 = vunpack.c.h.b16 %v198
    %v540 = vunpack.c.l.b16 %v199
    %v541 = vunpack.c.h.b16 %v199
    %v542 = vunpack.c.l.b16 %v200
    %v543 = vunpack.c.h.b16 %v200
    %v544 = vunpack.c.l.b16 %v201
    %v545 = vunpack.c.h.b16 %v201
    %v546 = vunpack.c.l.b16 %v202
    %v547 = vunpack.c.h.b16 %v202
    %v548 = vunpack.c.l.b16 %v203
    %v549 = vunpack.c.h.b16 %v203
    %v550 = vunpack.c.l.b16 %v204
    %v551 = vunpack.c.h.b16 %v204
    %v552 = vunpack.c.l.b16 %v205
    %v553 = vunpack.c.h.b16 %v205
    %v554 = vunpack.c.l.b16 %v206
    %v555 = vunpack.c.h.b16 %v206
    %v556 = vunpack.c.l.b16 %v207
    %v557 = vunpack.c.h.b16 %v207
    %v558 = vunpack.c.l.b16 %v208
    %v559 = vunpack.c.h.b16 %v208
    %v560 = vunpack.c.l.b16 %v209
    %v561 = vunpack.c.h.b16 %v209
    %v562 = vunpack.c.l.b16 %v210
    %v563 = vunpack.c.h.b16 %v210
    %v564 = vunpack.c.l.b16 %v211
    %v565 = vunpack.c.h.b16 %v211
    %v566 = vunpack.c.l.b16 %v212
    %v567 = vunpack.c.h.b16 %v212
    %v568 = vunpack.c.l.b16 %v213
    %v569 = vunpack.c.h.b16 %v213
    %v570 = vunpack.c.l.b16 %v214
    %v571 = vunpack.c.h.b16 %v214
    %v572 = vunpack.c.l.b16 %v215
    %v573 = vunpack.c.h.b16 %v215
    %v574 = vunpack.c.l.b16 %v216
    %v575 = vunpack.c.h.b16 %v216
    %v576 = vunpack.c.l.b16 %v217
    %v577 = vunpack.c.h.b16 %v217
    %v578 = vunpack.c.l.b16 %v218
    %v579 = vunpack.c.h.b16 %v218
    %v580 = vunpack.c.l.b16 %v219
    %v581 = vunpack.c.h.b16 %v219
    %v582 = vunpack.c.l.b16 %v220
    %v583 = vunpack.c.h.b16 %v220
    %v584 = vunpack.c.l.b16 %v221
    %v585 = vunpack.c.h.b16 %v221
    %v586 = vunpack.c.l.b16 %v222
    %v587 = vunpack.c.h.b16 %v222
    %v588 = vunpack.c.l.b16 %v223
    %v589 = vunpack.c.h.b16 %v223
    %v590 = vunpack.c.l.b16 %v224
    %v591 = vunpack.c.h.b16 %v224
    %v592 = vunpack.c.l.b16 %v225
    %v593 = vunpack.c.h.b16 %v225
    %v594 = vunpack.c.l.b16 %v226
    %v595 = vunpack.c.h.b16 %v226
    %v596 = vunpack.c.l.b16 %v227
    %v597 = vunpack.c.h.b16 %v227
    %v598 = vunpack.c.l.b16 %v228
    %v599 = vunpack.c.h.b16 %v228
    %v600 = vunpack.c.l.b16 %v229
    %v601 = vunpack.c.h.b16 %v229
    %v602 = vunpack.c.l.b16 %v230
    %v603 = vunpack.c.h.b16 %v230
    %v604 = vunpack.c.l.b16 %v231
    %v605 = vunpack.c.h.b16 %v231
    %v606 = vunpack.c.l.b16 %v232
    %v607 = vunpack.c.h.b16 %v232
    %v608 = vunpack.c.l.b16 %v233
    %v609 = vunpack.c.h.b16 %v233
    %v610 = vunpack.c.l.b16 %v234
    %v611 = vunpack.c.h.b16 %v234
    %v612 = vunpack.c.l.b16 %v235
    %v613 = vunpack.c.h.b16 %v235
    %v614 = vunpack.c.l.b16 %v236
    %v615 = vunpack.c.h.b16 %v236
    %v616 = vunpack.c.l.b16 %v237
    %v617 = vunpack.c.h.b16 %v237
    %v618 = vunpack.c.l.b16 %v238
    %v619 = vunpack.c.h.b16 %v238
    %v620 = vunpack.c.l.b16 %v239
    %v621 = vunpack.c.h.b16 %v239
    %v622 = vunpack.c.l.b16 %v240
    %v623 = vunpack.c.h.b16 %v240
    %v624 = vunpack.c.l.b16 %v241
    %v625 = vunpack.c.h.b16 %v241
    %v626 = vunpack.c.l.b16 %v242
    %v627 = vunpack.c.h.b16 %v242
    %v628 = vunpack.c.l.b16 %v243
    %v629 = vunpack.c.h.b16 %v243
    %v630 = vunpack.c.l.b16 %v244
    %v631 = vunpack.c.h.b16 %v244
    %v632 = vunpack.c.l.b16 %v245
    %v633 = vunpack.c.h.b16 %v245
    %v634 = vunpack.c.l.b16 %v246
    %v635 = vunpack.c.h.b16 %v246
    %v636 = vunpack.c.l.b16 %v247
    %v637 = vunpack.c.h.b16 %v247
    %v638 = vunpack.c.l.b16 %v248
    %v639 = vunpack.c.h.b16 %v248
    %v640 = vunpack.c.l.b16 %v249
    %v641 = vunpack.c.h.b16 %v249
    %v642 = vunpack.c.l.b16 %v250
    %v643 = vunpack.c.h.b16 %v250
    %v644 = vunpack.c.l.b16 %v251
    %v645 = vunpack.c.h.b16 %v251
    %v646 = vunpack.c.l.b16 %v252
    %v647 = vunpack.c.h.b16 %v252
    %v648 = vunpack.c.l.b16 %v253
    %v649 = vunpack.c.h.b16 %v253
    %v650 = vunpack.c.l.b16 %v254
    %v651 = vunpack.c.h.b16 %v254
    %v652 = vunpack.c.l.b16 %v255
    %v653 = vunpack.c.h.b16 %v255
    %v654 = vunpack.c.l.b16 %v256
    %v655 = vunpack.c.h.b16 %v256
    %v656 = vunpack.c.l.b16 %v257
    %v657 = vunpack.c.h.b16 %v257
    %v658 = vunpack.c.l.b16 %v258
    %v659 = vunpack.c.h.b16 %v258
    %v660 = vunpack.c.l.b16 %v259
    %v661 = vunpack.c.h.b16 %v259
    %v662 = vunpack.c.l.b16 %v260
    %v663 = vunpack.c.h.b16 %v260
    %v664 = vunpack.c.l.b16 %v261
    %v665 = vunpack.c.h.b16 %v261
    %v666 = vunpack.c.l.b16 %v262
    %v667 = vunpack.c.h.b16 %v262
    %v668 = vunpack.c.l.b16 %v263
    %v669 = vunpack.c.h.b16 %v263
    %v670 = vunpack.c.l.b16 %v264
    %v671 = vunpack.c.h.b16 %v264
    %v672 = vunpack.c.l.b16 %v265
    %v673 = vunpack.c.h.b16 %v265
    %v674 = vunpack.c.l.b16 %v266
    %v675 = vunpack.c.h.b16 %v266
    %v676 = vunpack.c.l.b16 %v267
    %v677 = vunpack.c.h.b16 %v267
    %v678 = vunpack.c.l.b16 %v268
    %v679 = vunpack.c.h.b16 %v268
    %v680 = vunpack.c.l.b16 %v269
    %v681 = vunpack.c.h.b16 %v269
    %v682 = vunpack.c.l.b16 %v270
    %v683 = vunpack.c.h.b16 %v270
    %v684 = vunpack.c.l.b16 %v271
    %v685 = vunpack.c.h.b16 %v271
    %v686 = vunpack.c.l.b16 %v272
    %v687 = vunpack.c.h.b16 %v272
    %v688 = vunpack.c.l.b16 %v273
    %v689 = vunpack.c.h.b16 %v273
    %v690 = vunpack.c.l.b16 %v274
    %v691 = vunpack.c.h.b16 %v274
    %v692 = vunpack.c.l.b16 %v275
    %v693 = vunpack.c.h.b16 %v275
    %v694 = vpack.c.b16 %v440, %v438
    %v695 = vpack.c.b16 %v441, %v439
    %v696 = vpack.c.b16 %v444, %v442
    %v697 = vpack.c.b16 %v445, %v443
    %v698 = vpack.c.b16 %v448, %v446
    %v699 = vpack.c.b16 %v449, %v447
    %v700 = vpack.c.b16 %v452, %v450
    %v701 = vpack.c.b16 %v453, %v451
    %v702 = vpack.c.b16 %v456, %v454
    %v703 = vpack.c.b16 %v457, %v455
    %v704 = vpack.c.b16 %v460, %v458
    %v705 = vpack.c.b16 %v461, %v459
    %v706 = vpack.c.b16 %v464, %v462
    %v707 = vpack.c.b16 %v465, %v463
    %v708 = vpack.c.b16 %v468, %v466
    %v709 = vpack.c.b16 %v469, %v467
    %v710 = vpack.c.b16 %v472, %v470
    %v711 = vpack.c.b16 %v473, %v471
    %v712 = vpack.c.b16 %v476, %v474
    %v713 = vpack.c.b16 %v477, %v475
    %v714 = vpack.c.b16 %v480, %v478
    %v715 = vpack.c.b16 %v481, %v479
    %v716 = vpack.c.b16 %v484, %v482
    %v717 = vpack.c.b16 %v485, %v483
    %v718 = vpack.c.b16 %v488, %v486
    %v719 = vpack.c.b16 %v489, %v487
    %v720 = vpack.c.b16 %v492, %v490
    %v721 = vpack.c.b16 %v493, %v491
    %v722 = vpack.c.b16 %v496, %v494
    %v723 = vpack.c.b16 %v497, %v495
    %v724 = vpack.c.b16 %v500, %v498
    %v725 = vpack.c.b16 %v501, %v499
    %v726 = vpack.c.b16 %v504, %v502
    %v727 = vpack.c.b16 %v505, %v503
    %v728 = vpack.c.b16 %v508, %v506
    %v729 = vpack.c.b16 %v509, %v507
    %v730 = vpack.c.b16 %v512, %v510
    %v731 = vpack.c.b16 %v513, %v511
    %v732 = vpack.c.b16 %v516, %v514
    %v733 = vpack.c.b16 %v517, %v515
    %v734 = vpack.c.b16 %v520, %v518
    %v735 = vpack.c.b16 %v521, %v519
    %v736 = vpack.c.b16 %v524, %v522
    %v737 = vpack.c.b16 %v525, %v523
    %v738 = vpack.c.b16 %v528, %v526
    %v739 = vpack.c.b16 %v529, %v527
    %v740 = vpack.c.b16 %v532, %v530
    %v741 = vpack.c.b16 %v533, %v531
    %v742 = vpack.c.b16 %v536, %v534
    %v743 = vpack.c.b16 %v537, %v535
    %v744 = vpack.c.b16 %v540, %v538
    %v745 = vpack.c.b16 %v541, %v539
    %v746 = vpack.c.b16 %v544, %v542
    %v747 = vpack.c.b16 %v545, %v543
    %v748 = vpack.c.b16 %v548, %v546
    %v749 = vpack.c.b16 %v549, %v547
    %v750 = vpack.c.b16 %v552, %v550
    %v751 = vpack.c.b16 %v553, %v551
    %v752 = vpack.c.b16 %v556, %v554
    %v753 = vpack.c.b16 %v557, %v555
    %v754 = vpack.c.b16 %v560, %v558
    %v755 = vpack.c.b16 %v561, %v559
    %v756 = vpack.c.b16 %v564, %v562
    %v757 = vpack.c.b16 %v565, %v563
    %v758 = vpack.c.b16 %v568, %v566
    %v759 = vpack.c.b16 %v569, %v567
    %v760 = vpack.c.b16 %v572, %v570
    %v761 = vpack.c.b16 %v573, %v571
    %v762 = vpack.c.b16 %v576, %v574
    %v763 = vpack.c.b16 %v577, %v575
    %v764 = vpack.c.b16 %v580, %v578
    %v765 = vpack.c.b16 %v581, %v579
    %v766 = vpack.c.b16 %v584, %v582
    %v767 = vpack.c.b16 %v585, %v583
    %v768 = vpack.c.b16 %v588, %v586
    %v769 = vpack.c.b16 %v589, %v587
    %v770 = vpack.c.b16 %v592, %v590
    %v771 = vpack.c.b16 %v593, %v591
    %v772 = vpack.c.b16 %v596, %v594
    %v773 = vpack.c.b16 %v597, %v595
    %v774 = vpack.c.b16 %v600, %v598
    %v775 = vpack.c.b16 %v601, %v599
    %v776 = vpack.c.b16 %v604, %v602
    %v777 = vpack.c.b16 %v605, %v603
    %v778 = vpack.c.b16 %v608, %v606
    %v779 = vpack.c.b16 %v609, %v607
    %v780 = vpack.c.b16 %v612, %v610
    %v781 = vpack.c.b16 %v613, %v611
    %v782 = vpack.c.b16 %v616, %v614
    %v783 = vpack.c.b16 %v617, %v615
    %v784 = vpack.c.b16 %v620, %v618
    %v785 = vpack.c.b16 %v621, %v619
    %v786 = vpack.c.b16 %v624, %v622
    %v787 = vpack.c.b16 %v625, %v623
    %v788 = vpack.c.b16 %v628, %v626
    %v789 = vpack.c.b16 %v629, %v627
    %v790 = vpack.c.b16 %v632, %v630
    %v791 = vpack.c.b16 %v633, %v631
    %v792 = vpack.c.b16 %v636, %v634
    %v793 = vpack.c.b16 %v637, %v635
    %v794 = vpack.c.b16 %v640, %v638
    %v795 = vpack.c.b16 %v641, %v639
    %v796 = vpack.c.b16 %v644, %v642
    %v797 = vpack.c.b16 %v645, %v643
    %v798 = vpack.c.b16 %v648, %v646
    %v799 = vpack.c.b16 %v649, %v647
    %v800 = vpack.c.b16 %v652, %v650
    %v801 = vpack.c.b16 %v653, %v651
    %v802 = vpack.c.b16 %v656, %v654
    %v803 = vpack.c.b16 %v657, %v655
    %v804 = vpack.c.b16 %v660, %v658
    %v805 = vpack.c.b16 %v661, %v659
    %v806 = vpack.c.b16 %v664, %v662
    %v807 = vpack.c.b16 %v665, %v663
    %v808 = vpack.c.b16 %v668, %v666
    %v809 = vpack.c.b16 %v669, %v667
    %v810 = vpack.c.b16 %v672, %v670
    %v811 = vpack.c.b16 %v673, %v671
    %v812 = vpack.c.b16 %v676, %v674
    %v813 = vpack.c.b16 %v677, %v675
    %v814 = vpack.c.b16 %v680, %v678
    %v815 = vpack.c.b16 %v681, %v679
    %v816 = vpack.c.b16 %v684, %v682
    %v817 = vpack.c.b16 %v685, %v683
    %v818 = vpack.c.b16 %v688, %v686
    %v819 = vpack.c.b16 %v689, %v687
    %v820 = vpack.c.b16 %v692, %v690
    %v821 = vpack.c.b16 %v693, %v691
    %950 = vmatpush.bf16.msra.mxu0 %v708
    %951 = vmatpush.bf16.msra.mxu0 %v706
    %952 = vmatpush.bf16.msra.mxu0 %v704
    %953 = vmatpush.bf16.msra.mxu0 %v702
    %954 = vmatpush.bf16.msra.mxu0 %v700
    %955 = vmatpush.bf16.msra.mxu0 %v698
    %956 = vmatpush.bf16.msra.mxu0 %v696
    %957 = vmatpush.bf16.msra.mxu0 %v694
    %958 = vmatmul.bf16.gmra.mxu0 %v294
    %v959 = vpop.f32.mrf.mxu0
    %v960 = vadd.f32 %v278, %v959
    %v961 = vpop.f32.mrf.mxu0
    %962 = vdwg.mxu0
    %963 = vmatpush.bf16.msra.mxu0 %v724
    %964 = vmatpush.bf16.msra.mxu0 %v722
    %965 = vmatpush.bf16.msra.mxu0 %v720
    %966 = vmatpush.bf16.msra.mxu0 %v718
    %967 = vmatpush.bf16.msra.mxu0 %v716
    %968 = vmatpush.bf16.msra.mxu0 %v714
    %969 = vmatpush.bf16.msra.mxu0 %v712
    %970 = vmatpush.bf16.msra.mxu0 %v710
    %971 = vmatmul.bf16.gmra.mxu0 %v295
    %v972 = vpop.f32.mrf.mxu0
    %v973 = vadd.f32 %v960, %v972
    %v974 = vpop.f32.mrf.mxu0
    %975 = vdwg.mxu0
    %976 = vmatpush.bf16.msra.mxu0 %v740
    %977 = vmatpush.bf16.msra.mxu0 %v738
    %978 = vmatpush.bf16.msra.mxu0 %v736
    %979 = vmatpush.bf16.msra.mxu0 %v734
    %980 = vmatpush.bf16.msra.mxu0 %v732
    %981 = vmatpush.bf16.msra.mxu0 %v730
    %982 = vmatpush.bf16.msra.mxu0 %v728
    %983 = vmatpush.bf16.msra.mxu0 %v726
    %984 = vmatmul.bf16.gmra.mxu0 %v296
    %v985 = vpop.f32.mrf.mxu0
    %v986 = vadd.f32 %v973, %v985
    %v987 = vpop.f32.mrf.mxu0
    %988 = vdwg.mxu0
    %989 = vmatpush.bf16.msra.mxu0 %v756
    %990 = vmatpush.bf16.msra.mxu0 %v754
    %991 = vmatpush.bf16.msra.mxu0 %v752
    %992 = vmatpush.bf16.msra.mxu0 %v750
    %993 = vmatpush.bf16.msra.mxu0 %v748
    %994 = vmatpush.bf16.msra.mxu0 %v746
    %995 = vmatpush.bf16.msra.mxu0 %v744
    %996 = vmatpush.bf16.msra.mxu0 %v742
    %997 = vmatmul.bf16.gmra.mxu0 %v297
    %v998 = vpop.f32.mrf.mxu0
    %v999 = vadd.f32 %v986, %v998
    %v1000 = vpop.f32.mrf.mxu0
    %1001 = vdwg.mxu0
    %1002 = vmatpush.bf16.msra.mxu0 %v772
    %1003 = vmatpush.bf16.msra.mxu0 %v770
    %1004 = vmatpush.bf16.msra.mxu0 %v768
    %1005 = vmatpush.bf16.msra.mxu0 %v766
    %1006 = vmatpush.bf16.msra.mxu0 %v764
    %1007 = vmatpush.bf16.msra.mxu0 %v762
    %1008 = vmatpush.bf16.msra.mxu0 %v760
    %1009 = vmatpush.bf16.msra.mxu0 %v758
    %1010 = vmatmul.bf16.gmra.mxu0 %v298
    %v1011 = vpop.f32.mrf.mxu0
    %v1012 = vadd.f32 %v999, %v1011
    %v1013 = vpop.f32.mrf.mxu0
    %1014 = vdwg.mxu0
    %1015 = vmatpush.bf16.msra.mxu0 %v788
    %1016 = vmatpush.bf16.msra.mxu0 %v786
    %1017 = vmatpush.bf16.msra.mxu0 %v784
    %1018 = vmatpush.bf16.msra.mxu0 %v782
    %1019 = vmatpush.bf16.msra.mxu0 %v780
    %1020 = vmatpush.bf16.msra.mxu0 %v778
    %1021 = vmatpush.bf16.msra.mxu0 %v776
    %1022 = vmatpush.bf16.msra.mxu0 %v774
    %1023 = vmatmul.bf16.gmra.mxu0 %v299
    %v1024 = vpop.f32.mrf.mxu0
    %v1025 = vadd.f32 %v1012, %v1024
    %v1026 = vpop.f32.mrf.mxu0
    %1027 = vdwg.mxu0
    %1028 = vmatpush.bf16.msra.mxu0 %v804
    %1029 = vmatpush.bf16.msra.mxu0 %v802
    %1030 = vmatpush.bf16.msra.mxu0 %v800
    %1031 = vmatpush.bf16.msra.mxu0 %v798
    %1032 = vmatpush.bf16.msra.mxu0 %v796
    %1033 = vmatpush.bf16.msra.mxu0 %v794
    %1034 = vmatpush.bf16.msra.mxu0 %v792
    %1035 = vmatpush.bf16.msra.mxu0 %v790
    %1036 = vmatmul.bf16.gmra.mxu0 %v300
    %v1037 = vpop.f32.mrf.mxu0
    %v1038 = vadd.f32 %v1025, %v1037
    %v1039 = vpop.f32.mrf.mxu0
    %1040 = vdwg.mxu0
    %1041 = vmatpush.bf16.msra.mxu0 %v820
    %1042 = vmatpush.bf16.msra.mxu0 %v818
    %1043 = vmatpush.bf16.msra.mxu0 %v816
    %1044 = vmatpush.bf16.msra.mxu0 %v814
    %1045 = vmatpush.bf16.msra.mxu0 %v812
    %1046 = vmatpush.bf16.msra.mxu0 %v810
    %1047 = vmatpush.bf16.msra.mxu0 %v808
    %1048 = vmatpush.bf16.msra.mxu0 %v806
    %1049 = vmatmul.bf16.gmra.mxu0 %v301
    %v1050 = vpop.f32.mrf.mxu0
    %v1051 = vadd.f32 %v1038, %v1050
    %v1052 = vpop.f32.mrf.mxu0
    %1053 = vdwg.mxu0
    %1054 = vmatpush.bf16.msra.mxu0 %v709
    %1055 = vmatpush.bf16.msra.mxu0 %v707
    %1056 = vmatpush.bf16.msra.mxu0 %v705
    %1057 = vmatpush.bf16.msra.mxu0 %v703
    %1058 = vmatpush.bf16.msra.mxu0 %v701
    %1059 = vmatpush.bf16.msra.mxu0 %v699
    %1060 = vmatpush.bf16.msra.mxu0 %v697
    %1061 = vmatpush.bf16.msra.mxu0 %v695
    %1062 = vmatmul.bf16.gmra.mxu0 %v294
    %v1063 = vpop.f32.mrf.mxu0
    %v1064 = vadd.f32 %v279, %v1063
    %v1065 = vpop.f32.mrf.mxu0
    %1066 = vdwg.mxu0
    %1067 = vmatpush.bf16.msra.mxu0 %v725
    %1068 = vmatpush.bf16.msra.mxu0 %v723
    %1069 = vmatpush.bf16.msra.mxu0 %v721
    %1070 = vmatpush.bf16.msra.mxu0 %v719
    %1071 = vmatpush.bf16.msra.mxu0 %v717
    %1072 = vmatpush.bf16.msra.mxu0 %v715
    %1073 = vmatpush.bf16.msra.mxu0 %v713
    %1074 = vmatpush.bf16.msra.mxu0 %v711
    %1075 = vmatmul.bf16.gmra.mxu0 %v295
    %v1076 = vpop.f32.mrf.mxu0
    %v1077 = vadd.f32 %v1064, %v1076
    %v1078 = vpop.f32.mrf.mxu0
    %1079 = vdwg.mxu0
    %1080 = vmatpush.bf16.msra.mxu0 %v741
    %1081 = vmatpush.bf16.msra.mxu0 %v739
    %1082 = vmatpush.bf16.msra.mxu0 %v737
    %1083 = vmatpush.bf16.msra.mxu0 %v735
    %1084 = vmatpush.bf16.msra.mxu0 %v733
    %1085 = vmatpush.bf16.msra.mxu0 %v731
    %1086 = vmatpush.bf16.msra.mxu0 %v729
    %1087 = vmatpush.bf16.msra.mxu0 %v727
    %1088 = vmatmul.bf16.gmra.mxu0 %v296
    %v1089 = vpop.f32.mrf.mxu0
    %v1090 = vadd.f32 %v1077, %v1089
    %v1091 = vpop.f32.mrf.mxu0
    %1092 = vdwg.mxu0
    %1093 = vmatpush.bf16.msra.mxu0 %v757
    %1094 = vmatpush.bf16.msra.mxu0 %v755
    %1095 = vmatpush.bf16.msra.mxu0 %v753
    %1096 = vmatpush.bf16.msra.mxu0 %v751
    %1097 = vmatpush.bf16.msra.mxu0 %v749
    %1098 = vmatpush.bf16.msra.mxu0 %v747
    %1099 = vmatpush.bf16.msra.mxu0 %v745
    %1100 = vmatpush.bf16.msra.mxu0 %v743
    %1101 = vmatmul.bf16.gmra.mxu0 %v297
    %v1102 = vpop.f32.mrf.mxu0
    %v1103 = vadd.f32 %v1090, %v1102
    %v1104 = vpop.f32.mrf.mxu0
    %1105 = vdwg.mxu0
    %1106 = vmatpush.bf16.msra.mxu0 %v773
    %1107 = vmatpush.bf16.msra.mxu0 %v771
    %1108 = vmatpush.bf16.msra.mxu0 %v769
    %1109 = vmatpush.bf16.msra.mxu0 %v767
    %1110 = vmatpush.bf16.msra.mxu0 %v765
    %1111 = vmatpush.bf16.msra.mxu0 %v763
    %1112 = vmatpush.bf16.msra.mxu0 %v761
    %1113 = vmatpush.bf16.msra.mxu0 %v759
    %1114 = vmatmul.bf16.gmra.mxu0 %v298
    %v1115 = vpop.f32.mrf.mxu0
    %v1116 = vadd.f32 %v1103, %v1115
    %v1117 = vpop.f32.mrf.mxu0
    %1118 = vdwg.mxu0
    %1119 = vmatpush.bf16.msra.mxu0 %v789
    %1120 = vmatpush.bf16.msra.mxu0 %v787
    %1121 = vmatpush.bf16.msra.mxu0 %v785
    %1122 = vmatpush.bf16.msra.mxu0 %v783
    %1123 = vmatpush.bf16.msra.mxu0 %v781
    %1124 = vmatpush.bf16.msra.mxu0 %v779
    %1125 = vmatpush.bf16.msra.mxu0 %v777
    %1126 = vmatpush.bf16.msra.mxu0 %v775
    %1127 = vmatmul.bf16.gmra.mxu0 %v299
    %v1128 = vpop.f32.mrf.mxu0
    %v1129 = vadd.f32 %v1116, %v1128
    %v1130 = vpop.f32.mrf.mxu0
    %1131 = vdwg.mxu0
    %1132 = vmatpush.bf16.msra.mxu0 %v805
    %1133 = vmatpush.bf16.msra.mxu0 %v803
    %1134 = vmatpush.bf16.msra.mxu0 %v801
    %1135 = vmatpush.bf16.msra.mxu0 %v799
    %1136 = vmatpush.bf16.msra.mxu0 %v797
    %1137 = vmatpush.bf16.msra.mxu0 %v795
    %1138 = vmatpush.bf16.msra.mxu0 %v793
    %1139 = vmatpush.bf16.msra.mxu0 %v791
    %1140 = vmatmul.bf16.gmra.mxu0 %v300
    %v1141 = vpop.f32.mrf.mxu0
    %v1142 = vadd.f32 %v1129, %v1141
    %v1143 = vpop.f32.mrf.mxu0
    %1144 = vdwg.mxu0
    %1145 = vmatpush.bf16.msra.mxu0 %v821
    %1146 = vmatpush.bf16.msra.mxu0 %v819
    %1147 = vmatpush.bf16.msra.mxu0 %v817
    %1148 = vmatpush.bf16.msra.mxu0 %v815
    %1149 = vmatpush.bf16.msra.mxu0 %v813
    %1150 = vmatpush.bf16.msra.mxu0 %v811
    %1151 = vmatpush.bf16.msra.mxu0 %v809
    %1152 = vmatpush.bf16.msra.mxu0 %v807
    %1153 = vmatmul.bf16.gmra.mxu0 %v301
    %v1154 = vpop.f32.mrf.mxu0
    %v1155 = vadd.f32 %v1142, %v1154
    %v1156 = vpop.f32.mrf.mxu0
    %1157 = vdwg.mxu0
    %v1158 = vmax.f32 %v1051, 0.0
    %v1159 = vmax.f32 %v1155, 0.0
    %v1160 = vld [vmem:[#allocation5] sm:$0x1]
    %v1162 = vperm.slane %v1160, 0
    %v1164 = vmul.f32 %v1158, %v1162
    %v1165 = vpack.c.bf16 %v1164, %v1164
    %v1166 = vld [vmem:[#allocation10] sm:$0xff]
    %v1167 = vld [vmem:[#allocation10 + $0x8] sm:$0xff]
    %v1168 = vld [vmem:[#allocation10 + $0x10] sm:$0xff]
    %v1169 = vld [vmem:[#allocation10 + $0x18] sm:$0xff]
    %v1170 = vld [vmem:[#allocation10 + $0x20] sm:$0xff]
    %v1171 = vld [vmem:[#allocation10 + $0x28] sm:$0xff]
    %v1172 = vld [vmem:[#allocation10 + $0x30] sm:$0xff]
    %v1173 = vld [vmem:[#allocation10 + $0x38] sm:$0xff]
    %v1174 = vld [vmem:[#allocation10 + $0x40] sm:$0xff]
    %v1175 = vld [vmem:[#allocation10 + $0x48] sm:$0xff]
    %v1176 = vld [vmem:[#allocation10 + $0x50] sm:$0xff]
    %v1177 = vld [vmem:[#allocation10 + $0x58] sm:$0xff]
    %v1178 = vld [vmem:[#allocation10 + $0x60] sm:$0xff]
    %v1179 = vld [vmem:[#allocation10 + $0x68] sm:$0xff]
    %v1180 = vld [vmem:[#allocation10 + $0x70] sm:$0xff]
    %v1181 = vld [vmem:[#allocation10 + $0x78] sm:$0xff]
    %v1182 = vld [vmem:[%s6] sm:$0x3]
    %v1184 = vperm.slane %v1182, 0
    %v1185 = vperm.slane %v1182, 1
    %v1204 = vunpack.c.l.b16 %v1166
    %v1205 = vunpack.c.h.b16 %v1166
    %v1206 = vunpack.c.l.b16 %v1167
    %v1207 = vunpack.c.h.b16 %v1167
    %v1208 = vunpack.c.l.b16 %v1168
    %v1209 = vunpack.c.h.b16 %v1168
    %v1210 = vunpack.c.l.b16 %v1169
    %v1211 = vunpack.c.h.b16 %v1169
    %v1212 = vunpack.c.l.b16 %v1170
    %v1213 = vunpack.c.h.b16 %v1170
    %v1214 = vunpack.c.l.b16 %v1171
    %v1215 = vunpack.c.h.b16 %v1171
    %v1216 = vunpack.c.l.b16 %v1172
    %v1217 = vunpack.c.h.b16 %v1172
    %v1218 = vunpack.c.l.b16 %v1173
    %v1219 = vunpack.c.h.b16 %v1173
    %v1220 = vunpack.c.l.b16 %v1174
    %v1221 = vunpack.c.h.b16 %v1174
    %v1222 = vunpack.c.l.b16 %v1175
    %v1223 = vunpack.c.h.b16 %v1175
    %v1224 = vunpack.c.l.b16 %v1176
    %v1225 = vunpack.c.h.b16 %v1176
    %v1226 = vunpack.c.l.b16 %v1177
    %v1227 = vunpack.c.h.b16 %v1177
    %v1228 = vunpack.c.l.b16 %v1178
    %v1229 = vunpack.c.h.b16 %v1178
    %v1230 = vunpack.c.l.b16 %v1179
    %v1231 = vunpack.c.h.b16 %v1179
    %v1232 = vunpack.c.l.b16 %v1180
    %v1233 = vunpack.c.h.b16 %v1180
    %v1234 = vunpack.c.l.b16 %v1181
    %v1235 = vunpack.c.h.b16 %v1181
    %v1236 = vpack.c.b16 %v1206, %v1204
    %v1237 = vpack.c.b16 %v1207, %v1205
    %v1238 = vpack.c.b16 %v1210, %v1208
    %v1239 = vpack.c.b16 %v1211, %v1209
    %v1240 = vpack.c.b16 %v1214, %v1212
    %v1241 = vpack.c.b16 %v1215, %v1213
    %v1242 = vpack.c.b16 %v1218, %v1216
    %v1243 = vpack.c.b16 %v1219, %v1217
    %v1244 = vpack.c.b16 %v1222, %v1220
    %v1245 = vpack.c.b16 %v1223, %v1221
    %v1246 = vpack.c.b16 %v1226, %v1224
    %v1247 = vpack.c.b16 %v1227, %v1225
    %v1248 = vpack.c.b16 %v1230, %v1228
    %v1249 = vpack.c.b16 %v1231, %v1229
    %v1250 = vpack.c.b16 %v1234, %v1232
    %v1251 = vpack.c.b16 %v1235, %v1233
    %1268 = vmatpush.bf16.msra.mxu0 %v1250
    %1269 = vmatpush.bf16.msra.mxu0 %v1248
    %1270 = vmatpush.bf16.msra.mxu0 %v1246
    %1271 = vmatpush.bf16.msra.mxu0 %v1244
    %1272 = vmatpush.bf16.msra.mxu0 %v1242
    %1273 = vmatpush.bf16.msra.mxu0 %v1240
    %1274 = vmatpush.bf16.msra.mxu0 %v1238
    %1275 = vmatpush.bf16.msra.mxu0 %v1236
    %1276 = vmatmul.bf16.gmra.mxu0 %v1165
    %v1277 = vpop.f32.mrf.mxu0
    %v1278 = vadd.f32 %v1184, %v1277
    %v1279 = vpop.f32.mrf.mxu0
    %1280 = vdwg.mxu0
    %1281 = vmatpush.bf16.msra.mxu0 %v1251
    %1282 = vmatpush.bf16.msra.mxu0 %v1249
    %1283 = vmatpush.bf16.msra.mxu0 %v1247
    %1284 = vmatpush.bf16.msra.mxu0 %v1245
    %1285 = vmatpush.bf16.msra.mxu0 %v1243
    %1286 = vmatpush.bf16.msra.mxu0 %v1241
    %1287 = vmatpush.bf16.msra.mxu0 %v1239
    %1288 = vmatpush.bf16.msra.mxu0 %v1237
    %1289 = vmatmul.bf16.gmra.mxu0 %v1165
    %v1290 = vpop.f32.mrf.mxu0
    %v1291 = vadd.f32 %v1185, %v1290
    %v1292 = vpop.f32.mrf.mxu0
    %1293 = vdwg.mxu0
    %v1294 = vadd.f32 %v1278, %v1291
    %1295 = vadd.xlane.f32.xlu0 %v1294
    %v1296 = vpop.xlane.xlu0 %1295
    %v1297 = vrcp.pop 256.0
    %v1298 = vmul.f32 256.0, %v1297
    %v1299 = vsub.f32 1.0, %v1298
    %v1300 = vmul.f32 %v1297, %v1299
    %v1301 = vadd.f32 %v1297, %v1300
    %vm1302 = vweird.f32 %v1297
    %v1303 = vsel %vm1302, %v1297, %v1301
    %v1304 = vmul.f32 %v1296, %v1303
    %v1305 = vsub.f32 %v1278, %v1304
    %v1306 = vsub.f32 %v1291, %v1304
    %v1307 = vmul.f32 %v1305, %v1305
    %v1308 = vmul.f32 %v1306, %v1306
    %v1309 = vadd.f32 %v1307, %v1308
    %1310 = vadd.xlane.f32.xlu0 %v1309
    %v1311 = vpop.xlane.xlu0 %1310
    %v1312 = vmul.f32 %v1311, %v1303
    %v1313 = vadd.f32 %v1312, 1e-05
    %v1314 = vrsqrt.pop %v1313
    %v1315 = vmul.f32 %v1314, %v1313
    %v1316 = vmul.f32 %v1315, %v1314
    %v1317 = vmul.f32 0.5, %v1316
    %v1318 = vsub.f32 1.5, %v1317
    %v1319 = vmul.f32 %v1314, %v1318
    %vm1320 = vweird.f32 %v1313
    %vm1321 = vweird.f32 %v1314
    %vm1322 = vmor %vm1320, %vm1321
    %v1323 = vsel %vm1322, %v1314, %v1319
    %v1324 = vmul.f32 %v1305, %v1323
    %v1325 = vmul.f32 %v1306, %v1323
    %v1326 = vld [vmem:[%s7] sm:$0x3]
    %v1328 = vperm.slane %v1326, 0
    %v1329 = vperm.slane %v1326, 1
    %v1332 = vmul.f32 %v1324, %v1328
    %v1333 = vmul.f32 %v1325, %v1329
    %v1334 = vld [vmem:[#allocation11] sm:$0x3]
    %v1336 = vperm.slane %v1334, 0
    %v1337 = vperm.slane %v1334, 1
    %v1340 = vadd.f32 %v1332, %v1336
    %v1341 = vadd.f32 %v1333, %v1337
    %v1342 = vmax.f32 %v1340, 0.0
    %v1343 = vmax.f32 %v1341, 0.0
    %v1344 = vld [vmem:[#allocation7] sm:$0xff]
    %v1345 = vld [vmem:[#allocation7 + $0x8] sm:$0xff]
    %v1346 = vadd.f32 %v1342, %v1344
    %v1347 = vadd.f32 %v1343, %v1345
    %v1348 = vmax.f32 %v1346, %v1347
    %v1349 = vsub.f32 %v1346, %v1348
    %v1350 = vmul.f32 %v1349, 1.442695
    %v1351 = vpow.pop %v1350
    %v1352 = vsub.f32 %v1347, %v1348
    %v1353 = vmul.f32 %v1352, 1.442695
    %v1354 = vpow.pop %v1353
    %v1355 = vadd.f32 %v1351, %v1354
    %v1356 = vrcp.pop %v1355
    %v1357 = vmul.f32 %v1351, %v1356
    %v1358 = vmul.f32 %v1354, %v1356
    %v1359 = vmul.f32 %v1158, %v1357
    %v1360 = vmul.f32 %v1158, %v1358
    %v1361 = vpack.c.bf16 %v1359, %v1359
    %v1362 = vpack.c.bf16 %v1360, %v1360
    %v1363 = vld [vmem:[#allocation13] sm:$0xf]
    %v1364 = vld [vmem:[#allocation13 + $0x4] sm:$0xf]
    %v1365 = vld [vmem:[#allocation13 + $0x8] sm:$0xf]
    %v1366 = vld [vmem:[#allocation13 + $0xc] sm:$0xf]
    %v1367 = vld [vmem:[#allocation13 + $0x10] sm:$0xf]
    %v1368 = vld [vmem:[#allocation13 + $0x14] sm:$0xf]
    %v1369 = vld [vmem:[#allocation13 + $0x18] sm:$0xf]
    %v1370 = vld [vmem:[#allocation13 + $0x1c] sm:$0xf]
    %v1371 = vld [vmem:[#allocation13 + $0x20] sm:$0xf]
    %v1372 = vld [vmem:[#allocation13 + $0x24] sm:$0xf]
    %v1373 = vld [vmem:[#allocation13 + $0x28] sm:$0xf]
    %v1374 = vld [vmem:[#allocation13 + $0x2c] sm:$0xf]
    %v1375 = vld [vmem:[#allocation13 + $0x30] sm:$0xf]
    %v1376 = vld [vmem:[#allocation13 + $0x34] sm:$0xf]
    %v1377 = vld [vmem:[#allocation13 + $0x38] sm:$0xf]
    %v1378 = vld [vmem:[#allocation13 + $0x3c] sm:$0xf]
    %v1379 = vld [vmem:[#allocation13 + $0x40] sm:$0xf]
    %v1380 = vld [vmem:[#allocation13 + $0x44] sm:$0xf]
    %v1381 = vld [vmem:[#allocation13 + $0x48] sm:$0xf]
    %v1382 = vld [vmem:[#allocation13 + $0x4c] sm:$0xf]
    %v1383 = vld [vmem:[#allocation13 + $0x50] sm:$0xf]
    %v1384 = vld [vmem:[#allocation13 + $0x54] sm:$0xf]
    %v1385 = vld [vmem:[#allocation13 + $0x58] sm:$0xf]
    %v1386 = vld [vmem:[#allocation13 + $0x5c] sm:$0xf]
    %v1387 = vld [vmem:[#allocation13 + $0x60] sm:$0xf]
    %v1388 = vld [vmem:[#allocation13 + $0x64] sm:$0xf]
    %v1389 = vld [vmem:[#allocation13 + $0x68] sm:$0xf]
    %v1390 = vld [vmem:[#allocation13 + $0x6c] sm:$0xf]
    %v1391 = vld [vmem:[#allocation13 + $0x70] sm:$0xf]
    %v1392 = vld [vmem:[#allocation13 + $0x74] sm:$0xf]
    %v1393 = vld [vmem:[#allocation13 + $0x78] sm:$0xf]
    %v1394 = vld [vmem:[#allocation13 + $0x7c] sm:$0xf]
    %v1395 = vld [vmem:[%s10] sm:$0x1]
    %v1397 = vperm.slane %v1395, 0
    %v1431 = vunpack.c.l.b16 %v1363
    %v1432 = vunpack.c.l.b16 %v1364
    %v1433 = vunpack.c.l.b16 %v1365
    %v1434 = vunpack.c.l.b16 %v1366
    %v1435 = vunpack.c.l.b16 %v1367
    %v1436 = vunpack.c.l.b16 %v1368
    %v1437 = vunpack.c.l.b16 %v1369
    %v1438 = vunpack.c.l.b16 %v1370
    %v1439 = vunpack.c.l.b16 %v1371
    %v1440 = vunpack.c.l.b16 %v1372
    %v1441 = vunpack.c.l.b16 %v1373
    %v1442 = vunpack.c.l.b16 %v1374
    %v1443 = vunpack.c.l.b16 %v1375
    %v1444 = vunpack.c.l.b16 %v1376
    %v1445 = vunpack.c.l.b16 %v1377
    %v1446 = vunpack.c.l.b16 %v1378
    %v1447 = vunpack.c.l.b16 %v1379
    %v1448 = vunpack.c.l.b16 %v1380
    %v1449 = vunpack.c.l.b16 %v1381
    %v1450 = vunpack.c.l.b16 %v1382
    %v1451 = vunpack.c.l.b16 %v1383
    %v1452 = vunpack.c.l.b16 %v1384
    %v1453 = vunpack.c.l.b16 %v1385
    %v1454 = vunpack.c.l.b16 %v1386
    %v1455 = vunpack.c.l.b16 %v1387
    %v1456 = vunpack.c.l.b16 %v1388
    %v1457 = vunpack.c.l.b16 %v1389
    %v1458 = vunpack.c.l.b16 %v1390
    %v1459 = vunpack.c.l.b16 %v1391
    %v1460 = vunpack.c.l.b16 %v1392
    %v1461 = vunpack.c.l.b16 %v1393
    %v1462 = vunpack.c.l.b16 %v1394
    %v1463 = vpack.c.b16 %v1432, %v1431
    %v1464 = vpack.c.b16 %v1434, %v1433
    %v1465 = vpack.c.b16 %v1436, %v1435
    %v1466 = vpack.c.b16 %v1438, %v1437
    %v1467 = vpack.c.b16 %v1440, %v1439
    %v1468 = vpack.c.b16 %v1442, %v1441
    %v1469 = vpack.c.b16 %v1444, %v1443
    %v1470 = vpack.c.b16 %v1446, %v1445
    %v1471 = vpack.c.b16 %v1448, %v1447
    %v1472 = vpack.c.b16 %v1450, %v1449
    %v1473 = vpack.c.b16 %v1452, %v1451
    %v1474 = vpack.c.b16 %v1454, %v1453
    %v1475 = vpack.c.b16 %v1456, %v1455
    %v1476 = vpack.c.b16 %v1458, %v1457
    %v1477 = vpack.c.b16 %v1460, %v1459
    %v1478 = vpack.c.b16 %v1462, %v1461
    %1495 = vmatpush.bf16.msra.mxu0 %v1470
    %1496 = vmatpush.bf16.msra.mxu0 %v1469
    %1497 = vmatpush.bf16.msra.mxu0 %v1468
    %1498 = vmatpush.bf16.msra.mxu0 %v1467
    %1499 = vmatpush.bf16.msra.mxu0 %v1466
    %1500 = vmatpush.bf16.msra.mxu0 %v1465
    %1501 = vmatpush.bf16.msra.mxu0 %v1464
    %1502 = vmatpush.bf16.msra.mxu0 %v1463
    %1503 = vmatmul.bf16.gmra.mxu0 %v1361
    %v1504 = vpop.f32.mrf.mxu0
    %v1505 = vadd.f32 %v1397, %v1504
    %v1506 = vpop.f32.mrf.mxu0
    %1507 = vdwg.mxu0
    %1508 = vmatpush.bf16.msra.mxu0 %v1478
    %1509 = vmatpush.bf16.msra.mxu0 %v1477
    %1510 = vmatpush.bf16.msra.mxu0 %v1476
    %1511 = vmatpush.bf16.msra.mxu0 %v1475
    %1512 = vmatpush.bf16.msra.mxu0 %v1474
    %1513 = vmatpush.bf16.msra.mxu0 %v1473
    %1514 = vmatpush.bf16.msra.mxu0 %v1472
    %1515 = vmatpush.bf16.msra.mxu0 %v1471
    %1516 = vmatmul.bf16.gmra.mxu0 %v1362
    %v1517 = vpop.f32.mrf.mxu0
    %v1518 = vadd.f32 %v1505, %v1517
    %v1519 = vpop.f32.mrf.mxu0
    %1520 = vdwg.mxu0
    %1521 = vst [vmem:[#allocation14] sm:$0xff] %v1518
    %1522 = vst [vmem:[#allocation15] sm:$0xff] %v1158
    %1523 = vst [vmem:[#allocation17] sm:$0xff] %v1159
    // Predicated region
    $region74: #{tpu_custom_call.1} parent=1 // pred_check
      _
    $region75: #{tpu_custom_call.1} parent=1 // pred_check_branch
      %1525 = sbr.rel (0) target = $region77
    $region76: #{tpu_custom_call.1} parent=1 // pred_region
      %1527 = vsyncadd [#allocation4], 0
      %s1529 = sshll.u32 [#allocation14], 4
      %s1530 = int_to_ptr.vmem [resolvable:$true] %s1529
      %s1531 = sshll.u32 %s11, 4
      %s1532 = int_to_ptr.hbm [resolvable:$true] %s1531
      %1534 = dma.vmem_to_hbm [thread:$0]  %s1530, 128, %s1532, [#allocation4]
    $region77: #{tpu_custom_call.1} parent=1 // pred_fallthru
      _
    // Predicated region
    $region78: #{tpu_custom_call.1} parent=1 // pred_check
      _
    $region79: #{tpu_custom_call.1} parent=1 // pred_check_branch
      %1536 = sbr.rel (0) target = $region81
    $region80: #{tpu_custom_call.1} parent=1 // pred_region
      %1538 = vsyncadd [#allocation16], 0
      %s1540 = sshll.u32 [#allocation15], 4
      %s1541 = int_to_ptr.vmem [resolvable:$true] %s1540
      %s1542 = sshll.u32 %s12, 4
      %s1543 = int_to_ptr.hbm [resolvable:$true] %s1542
      %1545 = dma.vmem_to_hbm [thread:$0]  %s1541, 128, %s1543, [#allocation16]
    $region81: #{tpu_custom_call.1} parent=1 // pred_fallthru
      _
    // Predicated region
    $region82: #{tpu_custom_call.1} parent=1 // pred_check
      _
    $region83: #{tpu_custom_call.1} parent=1 // pred_check_branch
      %1547 = sbr.rel (0) target = $region85
    $region84: #{tpu_custom_call.1} parent=1 // pred_region
      %1549 = vsyncadd [#allocation16], 0
      %s1551 = sshll.u32 [#allocation17], 4
      %s1552 = int_to_ptr.vmem [resolvable:$true] %s1551
      %s1553 = sshll.u32 %s13, 4
      %s1554 = int_to_ptr.hbm [resolvable:$true] %s1553
      %1556 = dma.vmem_to_hbm [thread:$0]  %s1552, 128, %s1554, [#allocation16]
    $region85: #{tpu_custom_call.1} parent=1 // pred_fallthru
      _
    // Predicated region
    $region86: #{tpu_custom_call.1} parent=1 // pred_check
      _
    $region87: #{tpu_custom_call.1} parent=1 // pred_check_branch
      %1558 = sbr.rel (0) target = $region89
    $region88: #{tpu_custom_call.1} parent=1 // pred_region
      %1560 = dma.done [#allocation4], 128
    $region89: #{tpu_custom_call.1} parent=1 // pred_fallthru
      _
    // Predicated region
    $region90: #{tpu_custom_call.1} parent=1 // pred_check
      _
    $region91: #{tpu_custom_call.1} parent=1 // pred_check_branch
      %1562 = sbr.rel (0) target = $region93
    $region92: #{tpu_custom_call.1} parent=1 // pred_region
      %1564 = dma.done [#allocation16], 128
    $region93: #{tpu_custom_call.1} parent=1 // pred_fallthru
      _
    // Predicated region
    $region94: #{tpu_custom_call.1} parent=1 // pred_check
      _
    $region95: #{tpu_custom_call.1} parent=1 // pred_check_branch
      %1566 = sbr.rel (0) target = $region97
    $region96: #{tpu_custom_call.1} parent=1 // pred_region
      %1568 = dma.done [#allocation16], 128
    $region97: #{tpu_custom_call.1} parent=1 // pred_fallthru
      _
    %1569 = vsyncpa [#allocation3], 1
    %1570 = vsyncpa [#allocation6], 1
    %1571 = vsyncpa [#allocation9], 1
    %1572 = vsyncpa [#allocation12], 1
    %1573 = vsyncpa [#allocation4], 1
    %1574 = vsyncpa [#allocation16], 1

</llo_original>
